<compile_context>
chip_gen: v5e
topology: v5e:2x2
jax: 0.10.0
libtpu: 0.0.40
codegen_flags: <defaults>
</compile_context>

<pallas_src>
import functools

import jax
import jax.numpy as jnp
import numpy as np
from jax.experimental import pallas as pl
from jax.experimental.pallas import tpu as pltpu


_NEG_INF = -1e30


def _round_up(x, m):
    return ((x + m - 1) // m) * m


# -----------------------------------------------------------------------------
# Kernel: one grid step == one chunk of t_chunk timesteps
# -----------------------------------------------------------------------------
def _decoder_kernel(emb_ref,    # (t_chunk*Bp, Hp) bf16  time-major embeddings, this chunk
                    h0_ref,     # (Bp, Hp)  f32          initial hidden state (padded)
                    wih_ref,    # (Hp, 3Hp) bf16          GRU input weights^T, gate blocks lane-aligned
                    whh_ref,    # (Hp, 3Hp) f32           GRU hidden weights^T (f32: recurrence accuracy)
                    bgi_ref,    # (1, 3Hp)  f32           b_ih with b_hh[r|z] folded in (n: input bias only)
                    bhn_ref,    # (1, Hp)   f32           hidden-side n-gate bias (stays inside r*(...))
                    wmlp_ref,   # (Hp, Vp)  bf16          output Linear weight^T, V-padded with 0
                    bmlp_ref,   # (1, Vp)   f32           output bias, padded columns = -1e30
                    out_ref,    # (t_chunk*Bp, Vp) f32    log-softmax output, this chunk
                    hout_ref,   # (Bp, Hp)  f32           final hidden state
                    h_scr,      # VMEM (Bp, Hp) f32       carried hidden state across chunks
                    gi_scr,     # VMEM (t_chunk*Bp, 3Hp) f32  input-gate projection for the chunk
                    hall_scr,   # VMEM (t_chunk*Bp, Hp)  f32  hidden state of every step in the chunk
                    *, seq_len, t_chunk, batch_pad, mask_tail):
    chunk = pl.program_id(0)
    hp = h0_ref.shape[1]          # padded hidden size (multiple of 128)

    @pl.when(chunk == 0)
    def _():
        h_scr[...] = h0_ref[...]

    # ---- chunk prologue (off the serial chain): x @ W_ih^T for every step, with the
    #      input bias and the r/z hidden biases already folded in ----
    gi_scr[...] = (
        jnp.dot(emb_ref[...], wih_ref[...], preferred_element_type=jnp.float32)
        + bgi_ref[...]
    )

    whh = whh_ref[...]                                        # keep f32 on the recurrence
    bhn = jnp.broadcast_to(bhn_ref[...], (batch_pad, hp))     # broadcast hoisted out of the loop

    # ---- sequential GRU recurrence: only the irreducible h -> h' chain remains ----
    # TODO(synk): advanced option - keep W_hh resident in MXU weight regs across steps via
    #             pltpu.matmul_push_rhs / matmul_acc_lhs / matmul_pop.
    def step(t, h):
        row = t * batch_pad                                   # multiple of 8 -> aligned slice
        gi = gi_scr[pl.ds(row, batch_pad), :]                 # (Bp, 3Hp)
        gh = jnp.dot(h, whh, preferred_element_type=jnp.float32)   # (Bp, 3Hp)
        # Gate slices land on 128-lane boundaries (Hp is a multiple of 128) -> no XLU rotates.
        rz = jax.nn.sigmoid(gi[:, :2 * hp] + gh[:, :2 * hp])  # fused r|z -> single EUP push
        r = rz[:, :hp]
        z = rz[:, hp:]
        n = jnp.tanh(gi[:, 2 * hp:] + r * (gh[:, 2 * hp:] + bhn))
        h_new = (1.0 - z) * n + z * h
        if mask_tail:  # only traced when T is not a multiple of t_chunk
            h_new = jnp.where(chunk * t_chunk + t < seq_len, h_new, h)
        hall_scr[pl.ds(row, batch_pad), :] = h_new
        return h_new

    # t_chunk bounds the unroll (full unroll of a small, fixed chunk; T itself may be large).
    h_last = jax.lax.fori_loop(0, t_chunk, step, h_scr[...], unroll=True)
    h_scr[...] = h_last

    @pl.when(chunk == pl.num_programs(0) - 1)
    def _():
        hout_ref[...] = h_last

    # ---- chunk epilogue: Linear + log-softmax, one lane-dense (Vp) store that the
    #      pipeline writes back while the next chunk's embeddings are DMA'd in ----
    # TODO(synk): at realistic vocab sizes, tile V with a streaming max/logsumexp so the
    #             (Hp, Vp) weight and (rows, Vp) output fit v7x's 64 MiB VMEM.
    logits = (
        jnp.dot(hall_scr[...].astype(jnp.bfloat16), wmlp_ref[...],
                preferred_element_type=jnp.float32)
        + bmlp_ref[...]
    )                                                         # padded cols ~ -1e30
    m = jnp.max(logits, axis=-1, keepdims=True)
    lse = m + jnp.log(jnp.sum(jnp.exp(logits - m), axis=-1, keepdims=True))
    out_ref[...] = logits - lse
    # TODO(synk): optionally store bf16 log-probs (halves the writeback, helps v5e most).


# -----------------------------------------------------------------------------
# Wrapper
# -----------------------------------------------------------------------------
def decoder_forward(tokens, hidden_in, params, *, t_chunk=4):
    """tokens: (B, T) int32, hidden_in: (1, B, H) f32.
    Returns (log_probs (B, T, V), hidden_out (1, B, H)) like the PyTorch module."""
    emb_table = params["embedding"]          # (input_size, H)
    w_ih = params["w_ih"]                    # (3H, H)  PyTorch layout, gate order r|z|n
    w_hh = params["w_hh"]                    # (3H, H)
    b_ih = params["b_ih"]                    # (3H,)
    b_hh = params["b_hh"]                    # (3H,)
    w_mlp = params["w_mlp"]                  # (V, H)
    b_mlp = params["b_mlp"]                  # (V,)

    B, T = tokens.shape
    H = emb_table.shape[1]
    V = w_mlp.shape[0]

    Bp = _round_up(B, 8)         # sublane-aligned per-step slices
    Hp = _round_up(H, 128)       # lane-aligned gate slices (r|z|n at 0 / Hp / 2Hp)
    Vp = _round_up(V, 128)       # lane-dense, unmasked output store
    t_chunk = max(1, min(t_chunk, T))
    num_chunks = (T + t_chunk - 1) // t_chunk
    Tp = num_chunks * t_chunk
    rows = t_chunk * Bp

    f32, bf16 = jnp.float32, jnp.bfloat16

    # Glue (XLA): embedding gather + dropout (eval -> identity) + layout/padding.
    # Padding H->Hp with zero weight rows/cols keeps the padded hidden lanes at exactly 0.
    # TODO(synk): nn.Dropout(0.5) is only active in training; treated as identity (eval).
    # TODO(synk): at realistic B*T*H, fuse the gather into the kernel via scalar-prefetched
    #             token ids (PrefetchScalarGridSpec) instead of wrapper-side jnp.take.
    emb = jnp.take(emb_table, tokens, axis=0)                    # (B, T, H)
    emb_t = jnp.transpose(emb, (1, 0, 2)).astype(bf16)           # (T, B, H)
    emb_p = jnp.zeros((Tp, Bp, Hp), bf16).at[:T, :B, :H].set(emb_t)
    emb_p = emb_p.reshape(Tp * Bp, Hp)                           # (Tp*Bp, Hp)

    h0_p = jnp.zeros((Bp, Hp), f32).at[:B, :H].set(hidden_in[0].astype(f32))

    def pad_gates(w_t, dtype):
        # (H, 3H) -> (Hp, 3Hp); each gate block placed at a 128-lane-aligned column offset.
        out = jnp.zeros((Hp, 3 * Hp), f32)
        for g in range(3):
            out = out.at[:H, g * Hp:g * Hp + H].set(w_t[:, g * H:(g + 1) * H].astype(f32))
        return out.astype(dtype)

    wih_p = pad_gates(jnp.transpose(w_ih), bf16)   # bf16: big off-chain matmul
    whh_p = pad_gates(jnp.transpose(w_hh), f32)    # f32: protect recurrence accuracy

    # b_gi = b_ih with the r/z parts of b_hh folded in (n gate keeps only the input bias;
    # the hidden-side n bias must stay inside r * (h @ W_hn^T + b_hn) per PyTorch semantics).
    bgi = jnp.zeros((1, 3 * Hp), f32)
    bgi = bgi.at[0, 0:H].set((b_ih[0:H] + b_hh[0:H]).astype(f32))                    # r
    bgi = bgi.at[0, Hp:Hp + H].set((b_ih[H:2 * H] + b_hh[H:2 * H]).astype(f32))      # z
    bgi = bgi.at[0, 2 * Hp:2 * Hp + H].set(b_ih[2 * H:3 * H].astype(f32))            # n (input)
    bhn = jnp.zeros((1, Hp), f32).at[0, :H].set(b_hh[2 * H:3 * H].astype(f32))

    wmlp_p = jnp.zeros((Hp, Vp), f32).at[:H, :V].set(
        jnp.transpose(w_mlp).astype(f32)).astype(bf16)           # (Hp, Vp) bf16
    bmlp_p = jnp.full((1, Vp), _NEG_INF, f32).at[0, :V].set(b_mlp.astype(f32))

    kernel = functools.partial(_decoder_kernel, seq_len=T, t_chunk=t_chunk,
                               batch_pad=Bp, mask_tail=(Tp != T))

    # Size the scoped VMEM limit from the resident buffers (double-buffered I/O + scratch).
    def _bytes(shape, dtype):
        return int(np.prod(shape)) * jnp.dtype(dtype).itemsize

    est = 2 * (_bytes((rows, Hp), bf16) + _bytes((Bp, Hp), f32)
               + _bytes((Hp, 3 * Hp), bf16) + _bytes((Hp, 3 * Hp), f32)
               + _bytes((1, 3 * Hp), f32) + _bytes((1, Hp), f32)
               + _bytes((Hp, Vp), bf16) + _bytes((1, Vp), f32)
               + _bytes((rows, Vp), f32) + _bytes((Bp, Hp), f32)) \
        + _bytes((Bp, Hp), f32) + _bytes((rows, 3 * Hp), f32) + _bytes((rows, Hp), f32)
    vmem_limit = int(min(64 * 1024 * 1024, max(4 * 1024 * 1024, 2 * est)))

    # TODO(synk): for v7x add a "parallel" batch-block grid axis so both TensorCores are used
    #             (the recurrence is independent across batch rows).
    out_p, hout_p = pl.pallas_call(
        kernel,
        out_shape=(
            jax.ShapeDtypeStruct((Tp * Bp, Vp), f32),
            jax.ShapeDtypeStruct((Bp, Hp), f32),
        ),
        grid_spec=pl.GridSpec(
            grid=(num_chunks,),
            in_specs=[
                pl.BlockSpec((rows, Hp), lambda i: (i, 0)),        # embeddings (streamed per chunk)
                pl.BlockSpec((Bp, Hp), lambda i: (0, 0)),          # h0
                pl.BlockSpec((Hp, 3 * Hp), lambda i: (0, 0)),      # W_ih^T (bf16)
                pl.BlockSpec((Hp, 3 * Hp), lambda i: (0, 0)),      # W_hh^T (f32)
                pl.BlockSpec((1, 3 * Hp), lambda i: (0, 0)),       # folded gi bias
                pl.BlockSpec((1, Hp), lambda i: (0, 0)),           # hidden-side n bias
                pl.BlockSpec((Hp, Vp), lambda i: (0, 0)),          # W_mlp^T (bf16, V-padded)
                pl.BlockSpec((1, Vp), lambda i: (0, 0)),           # b_mlp (-1e30 padded)
            ],
            out_specs=[
                pl.BlockSpec((rows, Vp), lambda i: (i, 0)),        # log-probs chunk (lane-dense)
                pl.BlockSpec((Bp, Hp), lambda i: (0, 0)),          # final hidden
            ],
            scratch_shapes=[
                pltpu.VMEM((Bp, Hp), f32),             # carried hidden state across chunks
                pltpu.VMEM((rows, 3 * Hp), f32),       # gi for the current chunk
                pltpu.VMEM((rows, Hp), f32),           # all hidden states of the chunk
            ],
        ),
        compiler_params=pltpu.CompilerParams(
            dimension_semantics=("arbitrary",),        # hidden state carried across chunks
            vmem_limit_bytes=vmem_limit,
        ),
    )(emb_p, h0_p, wih_p, whh_p, bgi, bhn, wmlp_p, bmlp_p)

    out = out_p.reshape(Tp, Bp, Vp)[:T, :B, :V]        # (T, B, V)
    out = jnp.transpose(out, (1, 0, 2))                # (B, T, V)
    return out, hout_p[:B, :H][None]                   # hidden: (1, B, H)


# -----------------------------------------------------------------------------
# Pure-JAX reference (numerical sanity check, all f32)
# -----------------------------------------------------------------------------
def decoder_reference(tokens, hidden_in, params):
    emb = jnp.take(params["embedding"], tokens, axis=0)   # (B, T, H)
    H = emb.shape[-1]
    w_ih, w_hh = params["w_ih"], params["w_hh"]
    b_ih, b_hh = params["b_ih"], params["b_hh"]

    def step(h, x_t):
        gi = x_t @ w_ih.T + b_ih
        gh = h @ w_hh.T + b_hh
        i_r, i_z, i_n = gi[:, :H], gi[:, H:2 * H], gi[:, 2 * H:]
        h_r, h_z, h_n = gh[:, :H], gh[:, H:2 * H], gh[:, 2 * H:]
        r = jax.nn.sigmoid(i_r + h_r)
        z = jax.nn.sigmoid(i_z + h_z)
        n = jnp.tanh(i_n + r * h_n)
        h_new = (1.0 - z) * n + z * h
        return h_new, h_new

    h_last, outs = jax.lax.scan(step, hidden_in[0], jnp.transpose(emb, (1, 0, 2)))
    outs = jnp.transpose(outs, (1, 0, 2))                  # (B, T, H)
    logits = outs @ params["w_mlp"].T + params["b_mlp"]    # (B, T, V)
    log_probs = jax.nn.log_softmax(logits, axis=2)
    return log_probs, h_last[None]


# -----------------------------------------------------------------------------
# Main
# -----------------------------------------------------------------------------
if __name__ == "__main__":
    input_size = 16      # vocab size for nn.Embedding
    hidden_size = 32
    output_size = 16
    B, T = 2, 8

    key = jax.random.PRNGKey(0)
    ks = jax.random.split(key, 10)
    scale = 0.1
    params = {
        "embedding": scale * jax.random.normal(ks[0], (input_size, hidden_size), jnp.float32),
        "w_ih":      scale * jax.random.normal(ks[1], (3 * hidden_size, hidden_size), jnp.float32),
        "w_hh":      scale * jax.random.normal(ks[2], (3 * hidden_size, hidden_size), jnp.float32),
        "b_ih":      scale * jax.random.normal(ks[3], (3 * hidden_size,), jnp.float32),
        "b_hh":      scale * jax.random.normal(ks[4], (3 * hidden_size,), jnp.float32),
        "w_mlp":     scale * jax.random.normal(ks[5], (output_size, hidden_size), jnp.float32),
        "b_mlp":     scale * jax.random.normal(ks[6], (output_size,), jnp.float32),
    }

    tokens = jax.random.randint(ks[7], (B, T), 0, input_size, dtype=jnp.int32)
    hidden_in = scale * jax.random.normal(ks[8], (1, B, hidden_size), jnp.float32)

    out, hidden_out = decoder_forward(tokens, hidden_in, params, t_chunk=4)
    out = jax.block_until_ready(out)
    hidden_out = jax.block_until_ready(hidden_out)

    # Sanity check against a pure-f32 JAX reference. The kernel uses bf16 for the embedding /
    # input-projection / output-projection operands (f32 accumulation, f32 recurrence), so a
    # slightly looser tolerance than pure-f32 is expected.
    ref_out, ref_hidden = decoder_reference(tokens, hidden_in, params)
    assert out.shape == (B, T, output_size)
    assert hidden_out.shape == (1, B, hidden_size)
    np.testing.assert_allclose(np.asarray(out), np.asarray(ref_out), rtol=3e-3, atol=3e-3)
    np.testing.assert_allclose(np.asarray(hidden_out), np.asarray(ref_hidden), rtol=3e-3, atol=3e-3)

    print("KERNEL_OK")
</pallas_src>

<mosaic_0001>
module attributes {stable_mosaic.version = 11 : i64} {
  func.func @_decoder_kernel(%arg0: i32, %arg1: memref<32x128xbf16, #tpu.memory_space<vmem>>, %arg2: memref<8x128xf32, #tpu.memory_space<vmem>>, %arg3: memref<128x384xbf16, #tpu.memory_space<vmem>>, %arg4: memref<128x384xf32, #tpu.memory_space<vmem>>, %arg5: memref<1x384xf32, #tpu.memory_space<vmem>>, %arg6: memref<1x128xf32, #tpu.memory_space<vmem>>, %arg7: memref<128x128xbf16, #tpu.memory_space<vmem>>, %arg8: memref<1x128xf32, #tpu.memory_space<vmem>>, %arg9: memref<32x128xf32, #tpu.memory_space<vmem>>, %arg10: memref<8x128xf32, #tpu.memory_space<vmem>>, %arg11: memref<8x128xf32, #tpu.memory_space<vmem>>, %arg12: memref<32x384xf32, #tpu.memory_space<vmem>>, %arg13: memref<32x128xf32, #tpu.memory_space<vmem>>) attributes {dimension_semantics = [#tpu.dimension_semantics<arbitrary>], iteration_bounds = array<i64: 2>, scalar_prefetch = 0 : i64, scratch_operands = 3 : i64, tpu.core_type = #tpu.core_type<tc>, window_params = [{transform_indices = @transform_0, window_bounds = array<i64: 32, 128>}, {pipeline_mode = #tpu.pipeline_mode<synchronous>, transform_indices = @transform_1, window_bounds = array<i64: 8, 128>}, {pipeline_mode = #tpu.pipeline_mode<synchronous>, transform_indices = @transform_2, window_bounds = array<i64: 128, 384>}, {pipeline_mode = #tpu.pipeline_mode<synchronous>, transform_indices = @transform_3, window_bounds = array<i64: 128, 384>}, {pipeline_mode = #tpu.pipeline_mode<synchronous>, transform_indices = @transform_4, window_bounds = array<i64: 1, 384>}, {pipeline_mode = #tpu.pipeline_mode<synchronous>, transform_indices = @transform_5, window_bounds = array<i64: 1, 128>}, {pipeline_mode = #tpu.pipeline_mode<synchronous>, transform_indices = @transform_6, window_bounds = array<i64: 128, 128>}, {pipeline_mode = #tpu.pipeline_mode<synchronous>, transform_indices = @transform_7, window_bounds = array<i64: 1, 128>}, {transform_indices = @transform_8, window_bounds = array<i64: 32, 128>}, {pipeline_mode = #tpu.pipeline_mode<synchronous>, transform_indices = @transform_9, window_bounds = array<i64: 8, 128>}]} {
    %c0_i32 = arith.constant 0 : i32
    %0 = arith.cmpi eq, %arg0, %c0_i32 : i32
    %1 = arith.extui %0 : i1 to i32
    %c0_i32_0 = arith.constant 0 : i32
    %2 = arith.cmpi ne, %1, %c0_i32_0 : i32
    scf.if %2 {
      %c0_53 = arith.constant 0 : index
      %c0_54 = arith.constant 0 : index
      %146 = vector.load %arg2[%c0_53, %c0_54] : memref<8x128xf32, #tpu.memory_space<vmem>>, vector<8x128xf32>
      %c0_55 = arith.constant 0 : index
      %c0_56 = arith.constant 0 : index
      %147 = vector.load %arg11[%c0_55, %c0_56] : memref<8x128xf32, #tpu.memory_space<vmem>>, vector<8x128xf32>
      tpu.vector_store %arg11[%c0_55, %c0_56], %146 {strides = array<i32>} : memref<8x128xf32, #tpu.memory_space<vmem>>, vector<8x128xf32>,
    } else {
    }
    %c0 = arith.constant 0 : index
    %c0_1 = arith.constant 0 : index
    %3 = vector.load %arg1[%c0, %c0_1] : memref<32x128xbf16, #tpu.memory_space<vmem>>, vector<32x128xbf16>
    %c0_2 = arith.constant 0 : index
    %c0_3 = arith.constant 0 : index
    %4 = vector.load %arg3[%c0_2, %c0_3] : memref<128x384xbf16, #tpu.memory_space<vmem>>, vector<128x384xbf16>
    %cst = arith.constant dense<0.000000e+00> : vector<32x384xf32>
    %5 = tpu.matmul %3, %4, %cst {dimension_numbers = #tpu.dot_dimension_numbers<[1], [0], [0], [1], [0, 0, 1, 1], [], []>} : vector<32x128xbf16>, vector<128x384xbf16>, vector<32x384xf32> -> vector<32x384xf32>
    %c0_4 = arith.constant 0 : index
    %c0_5 = arith.constant 0 : index
    %6 = vector.load %arg5[%c0_4, %c0_5] : memref<1x384xf32, #tpu.memory_space<vmem>>, vector<1x384xf32>
    %7 = vector.broadcast %6 : vector<1x384xf32> to vector<32x384xf32>
    %8 = arith.addf %5, %7 : vector<32x384xf32>
    %c0_6 = arith.constant 0 : index
    %c0_7 = arith.constant 0 : index
    %9 = vector.load %arg12[%c0_6, %c0_7] : memref<32x384xf32, #tpu.memory_space<vmem>>, vector<32x384xf32>
    tpu.vector_store %arg12[%c0_6, %c0_7], %8 {strides = array<i32>} : memref<32x384xf32, #tpu.memory_space<vmem>>, vector<32x384xf32>,
    %c0_8 = arith.constant 0 : index
    %c0_9 = arith.constant 0 : index
    %10 = vector.load %arg4[%c0_8, %c0_9] : memref<128x384xf32, #tpu.memory_space<vmem>>, vector<128x384xf32>
    %c0_10 = arith.constant 0 : index
    %c0_11 = arith.constant 0 : index
    %11 = vector.load %arg6[%c0_10, %c0_11] : memref<1x128xf32, #tpu.memory_space<vmem>>, vector<1x128xf32>
    %12 = vector.shape_cast %11 : vector<1x128xf32> to vector<1x128xf32>
    %13 = vector.broadcast %12 : vector<1x128xf32> to vector<8x128xf32>
    %c0_12 = arith.constant 0 : index
    %c0_13 = arith.constant 0 : index
    %14 = vector.load %arg11[%c0_12, %c0_13] : memref<8x128xf32, #tpu.memory_space<vmem>>, vector<8x128xf32>
    %c0_i32_14 = arith.constant 0 : i32
    %c8_i32 = arith.constant 8 : i32
    %15 = arith.muli %c0_i32_14, %c8_i32 : i32
    %16 = arith.index_cast %15 : i32 to index
    %c0_15 = arith.constant 0 : index
    %17 = vector.load %arg12[%16, %c0_15] : memref<32x384xf32, #tpu.memory_space<vmem>>, vector<8x384xf32>
    %cst_16 = arith.constant dense<0.000000e+00> : vector<8x384xf32>
    %18 = tpu.matmul %14, %10, %cst_16 {dimension_numbers = #tpu.dot_dimension_numbers<[1], [0], [0], [1], [0, 0, 1, 1], [], []>} : vector<8x128xf32>, vector<128x384xf32>, vector<8x384xf32> -> vector<8x384xf32>
    %19 = vector.extract_strided_slice %17 {offsets = [0, 0], sizes = [8, 256], strides = [1, 1]} : vector<8x384xf32> to vector<8x256xf32>
    %20 = vector.extract_strided_slice %18 {offsets = [0, 0], sizes = [8, 256], strides = [1, 1]} : vector<8x384xf32> to vector<8x256xf32>
    %21 = arith.addf %19, %20 : vector<8x256xf32>
    %22 = arith.negf %21 : vector<8x256xf32>
    %23 = math.exp %22 : vector<8x256xf32>
    %cst_17 = arith.constant 1.000000e+00 : f32
    %24 = vector.broadcast %cst_17 : f32 to vector<8x256xf32>
    %25 = arith.addf %24, %23 : vector<8x256xf32>
    %26 = arith.divf %24, %25 : vector<8x256xf32>
    %27 = vector.extract_strided_slice %26 {offsets = [0, 0], sizes = [8, 128], strides = [1, 1]} : vector<8x256xf32> to vector<8x128xf32>
    %28 = vector.extract_strided_slice %26 {offsets = [0, 128], sizes = [8, 128], strides = [1, 1]} : vector<8x256xf32> to vector<8x128xf32>
    %29 = vector.extract_strided_slice %17 {offsets = [0, 256], sizes = [8, 128], strides = [1, 1]} : vector<8x384xf32> to vector<8x128xf32>
    %30 = vector.extract_strided_slice %18 {offsets = [0, 256], sizes = [8, 128], strides = [1, 1]} : vector<8x384xf32> to vector<8x128xf32>
    %31 = arith.addf %30, %13 : vector<8x128xf32>
    %32 = arith.mulf %27, %31 : vector<8x128xf32>
    %33 = arith.addf %29, %32 : vector<8x128xf32>
    %34 = math.tanh %33 : vector<8x128xf32>
    %cst_18 = arith.constant 1.000000e+00 : f32
    %35 = vector.broadcast %cst_18 : f32 to vector<8x128xf32>
    %36 = arith.subf %35, %28 : vector<8x128xf32>
    %37 = arith.mulf %36, %34 : vector<8x128xf32>
    %38 = arith.mulf %28, %14 : vector<8x128xf32>
    %39 = arith.addf %37, %38 : vector<8x128xf32>
    %40 = arith.index_cast %15 : i32 to index
    %c0_19 = arith.constant 0 : index
    %41 = vector.load %arg13[%40, %c0_19] : memref<32x128xf32, #tpu.memory_space<vmem>>, vector<8x128xf32>
    tpu.vector_store %arg13[%40, %c0_19], %39 {strides = array<i32>} : memref<32x128xf32, #tpu.memory_space<vmem>>, vector<8x128xf32>,
    %c1_i32 = arith.constant 1 : i32
    %c8_i32_20 = arith.constant 8 : i32
    %42 = arith.muli %c1_i32, %c8_i32_20 : i32
    %43 = arith.index_cast %42 : i32 to index
    %c0_21 = arith.constant 0 : index
    %44 = vector.load %arg12[%43, %c0_21] : memref<32x384xf32, #tpu.memory_space<vmem>>, vector<8x384xf32>
    %cst_22 = arith.constant dense<0.000000e+00> : vector<8x384xf32>
    %45 = tpu.matmul %39, %10, %cst_22 {dimension_numbers = #tpu.dot_dimension_numbers<[1], [0], [0], [1], [0, 0, 1, 1], [], []>} : vector<8x128xf32>, vector<128x384xf32>, vector<8x384xf32> -> vector<8x384xf32>
    %46 = vector.extract_strided_slice %44 {offsets = [0, 0], sizes = [8, 256], strides = [1, 1]} : vector<8x384xf32> to vector<8x256xf32>
    %47 = vector.extract_strided_slice %45 {offsets = [0, 0], sizes = [8, 256], strides = [1, 1]} : vector<8x384xf32> to vector<8x256xf32>
    %48 = arith.addf %46, %47 : vector<8x256xf32>
    %49 = arith.negf %48 : vector<8x256xf32>
    %50 = math.exp %49 : vector<8x256xf32>
    %cst_23 = arith.constant 1.000000e+00 : f32
    %51 = vector.broadcast %cst_23 : f32 to vector<8x256xf32>
    %52 = arith.addf %51, %50 : vector<8x256xf32>
    %53 = arith.divf %51, %52 : vector<8x256xf32>
    %54 = vector.extract_strided_slice %53 {offsets = [0, 0], sizes = [8, 128], strides = [1, 1]} : vector<8x256xf32> to vector<8x128xf32>
    %55 = vector.extract_strided_slice %53 {offsets = [0, 128], sizes = [8, 128], strides = [1, 1]} : vector<8x256xf32> to vector<8x128xf32>
    %56 = vector.extract_strided_slice %44 {offsets = [0, 256], sizes = [8, 128], strides = [1, 1]} : vector<8x384xf32> to vector<8x128xf32>
    %57 = vector.extract_strided_slice %45 {offsets = [0, 256], sizes = [8, 128], strides = [1, 1]} : vector<8x384xf32> to vector<8x128xf32>
    %58 = arith.addf %57, %13 : vector<8x128xf32>
    %59 = arith.mulf %54, %58 : vector<8x128xf32>
    %60 = arith.addf %56, %59 : vector<8x128xf32>
    %61 = math.tanh %60 : vector<8x128xf32>
    %cst_24 = arith.constant 1.000000e+00 : f32
    %62 = vector.broadcast %cst_24 : f32 to vector<8x128xf32>
    %63 = arith.subf %62, %55 : vector<8x128xf32>
    %64 = arith.mulf %63, %61 : vector<8x128xf32>
    %65 = arith.mulf %55, %39 : vector<8x128xf32>
    %66 = arith.addf %64, %65 : vector<8x128xf32>
    %67 = arith.index_cast %42 : i32 to index
    %c0_25 = arith.constant 0 : index
    %68 = vector.load %arg13[%67, %c0_25] : memref<32x128xf32, #tpu.memory_space<vmem>>, vector<8x128xf32>
    tpu.vector_store %arg13[%67, %c0_25], %66 {strides = array<i32>} : memref<32x128xf32, #tpu.memory_space<vmem>>, vector<8x128xf32>,
    %c2_i32 = arith.constant 2 : i32
    %c8_i32_26 = arith.constant 8 : i32
    %69 = arith.muli %c2_i32, %c8_i32_26 : i32
    %70 = arith.index_cast %69 : i32 to index
    %c0_27 = arith.constant 0 : index
    %71 = vector.load %arg12[%70, %c0_27] : memref<32x384xf32, #tpu.memory_space<vmem>>, vector<8x384xf32>
    %cst_28 = arith.constant dense<0.000000e+00> : vector<8x384xf32>
    %72 = tpu.matmul %66, %10, %cst_28 {dimension_numbers = #tpu.dot_dimension_numbers<[1], [0], [0], [1], [0, 0, 1, 1], [], []>} : vector<8x128xf32>, vector<128x384xf32>, vector<8x384xf32> -> vector<8x384xf32>
    %73 = vector.extract_strided_slice %71 {offsets = [0, 0], sizes = [8, 256], strides = [1, 1]} : vector<8x384xf32> to vector<8x256xf32>
    %74 = vector.extract_strided_slice %72 {offsets = [0, 0], sizes = [8, 256], strides = [1, 1]} : vector<8x384xf32> to vector<8x256xf32>
    %75 = arith.addf %73, %74 : vector<8x256xf32>
    %76 = arith.negf %75 : vector<8x256xf32>
    %77 = math.exp %76 : vector<8x256xf32>
    %cst_29 = arith.constant 1.000000e+00 : f32
    %78 = vector.broadcast %cst_29 : f32 to vector<8x256xf32>
    %79 = arith.addf %78, %77 : vector<8x256xf32>
    %80 = arith.divf %78, %79 : vector<8x256xf32>
    %81 = vector.extract_strided_slice %80 {offsets = [0, 0], sizes = [8, 128], strides = [1, 1]} : vector<8x256xf32> to vector<8x128xf32>
    %82 = vector.extract_strided_slice %80 {offsets = [0, 128], sizes = [8, 128], strides = [1, 1]} : vector<8x256xf32> to vector<8x128xf32>
    %83 = vector.extract_strided_slice %71 {offsets = [0, 256], sizes = [8, 128], strides = [1, 1]} : vector<8x384xf32> to vector<8x128xf32>
    %84 = vector.extract_strided_slice %72 {offsets = [0, 256], sizes = [8, 128], strides = [1, 1]} : vector<8x384xf32> to vector<8x128xf32>
    %85 = arith.addf %84, %13 : vector<8x128xf32>
    %86 = arith.mulf %81, %85 : vector<8x128xf32>
    %87 = arith.addf %83, %86 : vector<8x128xf32>
    %88 = math.tanh %87 : vector<8x128xf32>
    %cst_30 = arith.constant 1.000000e+00 : f32
    %89 = vector.broadcast %cst_30 : f32 to vector<8x128xf32>
    %90 = arith.subf %89, %82 : vector<8x128xf32>
    %91 = arith.mulf %90, %88 : vector<8x128xf32>
    %92 = arith.mulf %82, %66 : vector<8x128xf32>
    %93 = arith.addf %91, %92 : vector<8x128xf32>
    %94 = arith.index_cast %69 : i32 to index
    %c0_31 = arith.constant 0 : index
    %95 = vector.load %arg13[%94, %c0_31] : memref<32x128xf32, #tpu.memory_space<vmem>>, vector<8x128xf32>
    tpu.vector_store %arg13[%94, %c0_31], %93 {strides = array<i32>} : memref<32x128xf32, #tpu.memory_space<vmem>>, vector<8x128xf32>,
    %c3_i32 = arith.constant 3 : i32
    %c8_i32_32 = arith.constant 8 : i32
    %96 = arith.muli %c3_i32, %c8_i32_32 : i32
    %97 = arith.index_cast %96 : i32 to index
    %c0_33 = arith.constant 0 : index
    %98 = vector.load %arg12[%97, %c0_33] : memref<32x384xf32, #tpu.memory_space<vmem>>, vector<8x384xf32>
    %cst_34 = arith.constant dense<0.000000e+00> : vector<8x384xf32>
    %99 = tpu.matmul %93, %10, %cst_34 {dimension_numbers = #tpu.dot_dimension_numbers<[1], [0], [0], [1], [0, 0, 1, 1], [], []>} : vector<8x128xf32>, vector<128x384xf32>, vector<8x384xf32> -> vector<8x384xf32>
    %100 = vector.extract_strided_slice %98 {offsets = [0, 0], sizes = [8, 256], strides = [1, 1]} : vector<8x384xf32> to vector<8x256xf32>
    %101 = vector.extract_strided_slice %99 {offsets = [0, 0], sizes = [8, 256], strides = [1, 1]} : vector<8x384xf32> to vector<8x256xf32>
    %102 = arith.addf %100, %101 : vector<8x256xf32>
    %103 = arith.negf %102 : vector<8x256xf32>
    %104 = math.exp %103 : vector<8x256xf32>
    %cst_35 = arith.constant 1.000000e+00 : f32
    %105 = vector.broadcast %cst_35 : f32 to vector<8x256xf32>
    %106 = arith.addf %105, %104 : vector<8x256xf32>
    %107 = arith.divf %105, %106 : vector<8x256xf32>
    %108 = vector.extract_strided_slice %107 {offsets = [0, 0], sizes = [8, 128], strides = [1, 1]} : vector<8x256xf32> to vector<8x128xf32>
    %109 = vector.extract_strided_slice %107 {offsets = [0, 128], sizes = [8, 128], strides = [1, 1]} : vector<8x256xf32> to vector<8x128xf32>
    %110 = vector.extract_strided_slice %98 {offsets = [0, 256], sizes = [8, 128], strides = [1, 1]} : vector<8x384xf32> to vector<8x128xf32>
    %111 = vector.extract_strided_slice %99 {offsets = [0, 256], sizes = [8, 128], strides = [1, 1]} : vector<8x384xf32> to vector<8x128xf32>
    %112 = arith.addf %111, %13 : vector<8x128xf32>
    %113 = arith.mulf %108, %112 : vector<8x128xf32>
    %114 = arith.addf %110, %113 : vector<8x128xf32>
    %115 = math.tanh %114 : vector<8x128xf32>
    %cst_36 = arith.constant 1.000000e+00 : f32
    %116 = vector.broadcast %cst_36 : f32 to vector<8x128xf32>
    %117 = arith.subf %116, %109 : vector<8x128xf32>
    %118 = arith.mulf %117, %115 : vector<8x128xf32>
    %119 = arith.mulf %109, %93 : vector<8x128xf32>
    %120 = arith.addf %118, %119 : vector<8x128xf32>
    %121 = arith.index_cast %96 : i32 to index
    %c0_37 = arith.constant 0 : index
    %122 = vector.load %arg13[%121, %c0_37] : memref<32x128xf32, #tpu.memory_space<vmem>>, vector<8x128xf32>
    tpu.vector_store %arg13[%121, %c0_37], %120 {strides = array<i32>} : memref<32x128xf32, #tpu.memory_space<vmem>>, vector<8x128xf32>,
    %c4_i32 = arith.constant 4 : i32
    %c0_38 = arith.constant 0 : index
    %c0_39 = arith.constant 0 : index
    %123 = vector.load %arg11[%c0_38, %c0_39] : memref<8x128xf32, #tpu.memory_space<vmem>>, vector<8x128xf32>
    tpu.vector_store %arg11[%c0_38, %c0_39], %120 {strides = array<i32>} : memref<8x128xf32, #tpu.memory_space<vmem>>, vector<8x128xf32>,
    %c1_i32_40 = arith.constant 1 : i32
    %124 = arith.cmpi eq, %arg0, %c1_i32_40 : i32
    %125 = arith.extui %124 : i1 to i32
    %c0_i32_41 = arith.constant 0 : i32
    %126 = arith.cmpi ne, %125, %c0_i32_41 : i32
    scf.if %126 {
      %c0_53 = arith.constant 0 : index
      %c0_54 = arith.constant 0 : index
      %146 = vector.load %arg10[%c0_53, %c0_54] : memref<8x128xf32, #tpu.memory_space<vmem>>, vector<8x128xf32>
      tpu.vector_store %arg10[%c0_53, %c0_54], %120 {strides = array<i32>} : memref<8x128xf32, #tpu.memory_space<vmem>>, vector<8x128xf32>,
    } else {
    }
    %c0_42 = arith.constant 0 : index
    %c0_43 = arith.constant 0 : index
    %127 = vector.load %arg13[%c0_42, %c0_43] : memref<32x128xf32, #tpu.memory_space<vmem>>, vector<32x128xf32>
    %128 = arith.truncf %127 : vector<32x128xf32> to vector<32x128xbf16>
    %c0_44 = arith.constant 0 : index
    %c0_45 = arith.constant 0 : index
    %129 = vector.load %arg7[%c0_44, %c0_45] : memref<128x128xbf16, #tpu.memory_space<vmem>>, vector<128x128xbf16>
    %cst_46 = arith.constant dense<0.000000e+00> : vector<32x128xf32>
    %130 = tpu.matmul %128, %129, %cst_46 {dimension_numbers = #tpu.dot_dimension_numbers<[1], [0], [0], [1], [0, 0, 1, 1], [], []>} : vector<32x128xbf16>, vector<128x128xbf16>, vector<32x128xf32> -> vector<32x128xf32>
    %c0_47 = arith.constant 0 : index
    %c0_48 = arith.constant 0 : index
    %131 = vector.load %arg8[%c0_47, %c0_48] : memref<1x128xf32, #tpu.memory_space<vmem>>, vector<1x128xf32>
    %132 = vector.broadcast %131 : vector<1x128xf32> to vector<32x128xf32>
    %133 = arith.addf %130, %132 : vector<32x128xf32>
    %cst_49 = arith.constant dense<0xFF800000> : vector<32xf32>
    %134 = vector.multi_reduction <maximumf>, %133, %cst_49 [1] : vector<32x128xf32> to vector<32xf32>
    %135 = vector.shape_cast %134 : vector<32xf32> to vector<32x1xf32>
    %136 = vector.broadcast %135 : vector<32x1xf32> to vector<32x128xf32>
    %137 = arith.subf %133, %136 : vector<32x128xf32>
    %138 = math.exp %137 : vector<32x128xf32>
    %cst_50 = arith.constant dense<0.000000e+00> : vector<32xf32>
    %139 = vector.multi_reduction <add>, %138, %cst_50 [1] : vector<32x128xf32> to vector<32xf32>
    %140 = vector.shape_cast %139 : vector<32xf32> to vector<32x1xf32>
    %141 = math.log %140 : vector<32x1xf32>
    %142 = arith.addf %135, %141 : vector<32x1xf32>
    %143 = vector.broadcast %142 : vector<32x1xf32> to vector<32x128xf32>
    %144 = arith.subf %133, %143 : vector<32x128xf32>
    %c0_51 = arith.constant 0 : index
    %c0_52 = arith.constant 0 : index
    %145 = vector.load %arg9[%c0_51, %c0_52] : memref<32x128xf32, #tpu.memory_space<vmem>>, vector<32x128xf32>
    tpu.vector_store %arg9[%c0_51, %c0_52], %144 {strides = array<i32>} : memref<32x128xf32, #tpu.memory_space<vmem>>, vector<32x128xf32>,
    return
  }
  func.func @transform_0(%arg0: i32) -> (i32, i32) {
    %c0_i32 = arith.constant 0 : i32
    %c0_i32_0 = arith.constant 0 : i32
    return %arg0, %c0_i32 : i32, i32
  }
  func.func @transform_1(%arg0: i32) -> (i32, i32) {
    %c0_i32 = arith.constant 0 : i32
    %c0_i32_0 = arith.constant 0 : i32
    %c0_i32_1 = arith.constant 0 : i32
    return %c0_i32, %c0_i32_0 : i32, i32
  }
  func.func @transform_2(%arg0: i32) -> (i32, i32) {
    %c0_i32 = arith.constant 0 : i32
    %c0_i32_0 = arith.constant 0 : i32
    %c0_i32_1 = arith.constant 0 : i32
    return %c0_i32, %c0_i32_0 : i32, i32
  }
  func.func @transform_3(%arg0: i32) -> (i32, i32) {
    %c0_i32 = arith.constant 0 : i32
    %c0_i32_0 = arith.constant 0 : i32
    %c0_i32_1 = arith.constant 0 : i32
    return %c0_i32, %c0_i32_0 : i32, i32
  }
  func.func @transform_4(%arg0: i32) -> (i32, i32) {
    %c0_i32 = arith.constant 0 : i32
    %c0_i32_0 = arith.constant 0 : i32
    %c0_i32_1 = arith.constant 0 : i32
    return %c0_i32, %c0_i32_0 : i32, i32
  }
  func.func @transform_5(%arg0: i32) -> (i32, i32) {
    %c0_i32 = arith.constant 0 : i32
    %c0_i32_0 = arith.constant 0 : i32
    %c0_i32_1 = arith.constant 0 : i32
    return %c0_i32, %c0_i32_0 : i32, i32
  }
  func.func @transform_6(%arg0: i32) -> (i32, i32) {
    %c0_i32 = arith.constant 0 : i32
    %c0_i32_0 = arith.constant 0 : i32
    %c0_i32_1 = arith.constant 0 : i32
    return %c0_i32, %c0_i32_0 : i32, i32
  }
  func.func @transform_7(%arg0: i32) -> (i32, i32) {
    %c0_i32 = arith.constant 0 : i32
    %c0_i32_0 = arith.constant 0 : i32
    %c0_i32_1 = arith.constant 0 : i32
    return %c0_i32, %c0_i32_0 : i32, i32
  }
  func.func @transform_8(%arg0: i32) -> (i32, i32) {
    %c0_i32 = arith.constant 0 : i32
    %c0_i32_0 = arith.constant 0 : i32
    return %arg0, %c0_i32 : i32, i32
  }
  func.func @transform_9(%arg0: i32) -> (i32, i32) {
    %c0_i32 = arith.constant 0 : i32
    %c0_i32_0 = arith.constant 0 : i32
    %c0_i32_1 = arith.constant 0 : i32
    return %c0_i32, %c0_i32_0 : i32, i32
  }
}

</mosaic_0001>

<llo_original>
// kernel: tpu_custom_call.1
$region0: #{tpu_custom_call.1}
  #allocation0 [shape = 'u32[]', space=smem, size = 0x4, offset = 0x4, fixed_abs, tag = 'smem constant byte address 0x4 - core index']
  #allocation1 [shape = 'u32[72,128]{1,0:T(1,128)}', space=vmem, size = 0x9000, scoped, tag = 'internal scratch']
  #allocation2 [shape = 'f32[8,128]{1,0:T(8,128)}', space=vmem, size = 0x1000, scoped, tag = 'scratch operand']
  #allocation3 [shape = 'f32[32,384]{1,0:T(8,128)}', space=vmem, size = 0xc000, scoped, tag = 'scratch operand']
  #allocation4 [shape = 'f32[32,128]{1,0:T(8,128)}', space=vmem, size = 0x4000, scoped, tag = 'scratch operand']
  %s0 = inlined_call_operand.hbm [shape: bf16[64,128], index: 0, kind: input, shape index: {}]
  %s1 = inlined_call_operand.hbm [shape: f32[8,128], index: 1, kind: input, shape index: {}]
  %s2 = inlined_call_operand.hbm [shape: bf16[128,384], index: 2, kind: input, shape index: {}]
  %s3 = inlined_call_operand.hbm [shape: f32[128,384], index: 3, kind: input, shape index: {}]
  %s4 = inlined_call_operand.vmem [shape: f32[1,384], index: 4, kind: input, shape index: {}]
  %s5 = inlined_call_operand.vmem [shape: f32[1,128], index: 5, kind: input, shape index: {}]
  %s6 = inlined_call_operand.hbm [shape: bf16[128,128], index: 6, kind: input, shape index: {}]
  %s7 = inlined_call_operand.vmem [shape: f32[1,128], index: 7, kind: input, shape index: {}]
  %s8 = inlined_call_operand.hbm [shape: f32[64,128], index: 8, kind: output, shape index: {0}]
  %s9 = inlined_call_operand.hbm [shape: f32[8,128], index: 9, kind: output, shape index: {1}]
  %10 = xla_tuple %s8, %s9
  %s11 = sld [smem:[#allocation0]]
  $region101: #{tpu_custom_call.1} parent=0
    _
  %s13 = ssub.s32 1, %s11
  %s14 = scalar_select 0, %s13, %s11
  $region1: #{tpu_custom_call.1} parent=0
    #allocation5 [shape = 'u8[16384]{0}', space=vmem, size = 0x4000, scoped, tag = 'input window, operand 0']
    #allocation6 [shape = 's32[2]{0}', space=sflag, size = 0x8, scoped, tag = 'scoped memory for tpu_custom_call.1']
    #allocation7 [shape = 's32[2]{0}', space=sflag, size = 0x8, scoped, tag = 'scoped memory for tpu_custom_call.1']
    #allocation8 [shape = 'u8[4096]{0}', space=vmem, size = 0x1000, scoped, tag = 'input window, operand 1, single buffered']
    #allocation9 [shape = 's32[1]{0}', space=sflag, size = 0x4, scoped, tag = 'scoped memory for tpu_custom_call.1']
    #allocation10 [shape = 'u8[98304]{0}', space=vmem, size = 0x18000, scoped, tag = 'input window, operand 2, single buffered']
    #allocation11 [shape = 'u8[196608]{0}', space=vmem, size = 0x30000, scoped, tag = 'input window, operand 3, single buffered']
    #allocation12 [shape = 's32[1]{0}', space=sflag, size = 0x4, scoped, tag = 'scoped memory for tpu_custom_call.1']
    #allocation13 [shape = 'u8[32768]{0}', space=vmem, size = 0x8000, scoped, tag = 'input window, operand 6, single buffered']
    #allocation14 [shape = 'u8[32768]{0}', space=vmem, size = 0x8000, scoped, tag = 'output window, operand 0']
    #allocation15 [shape = 'u8[4096]{0}', space=vmem, size = 0x1000, scoped, tag = 'output window, operand 1, single buffered']
    #allocation16 [shape = 's32[1]{0}', space=sflag, size = 0x4, scoped, tag = 'scoped memory for tpu_custom_call.1']
    %15 = vsyncpa [#allocation6], 0
    %s16 = scalar_lea.sflag [#allocation6], 1
    %17 = vsyncpa %s16, 0
    %18 = vsyncpa [#allocation9], 0
    %19 = vsyncpa [#allocation12], 0
    %20 = vsyncpa [#allocation7], 0
    %s21 = scalar_lea.sflag [#allocation7], 1
    %22 = vsyncpa %s21, 0
    %23 = vsyncpa [#allocation16], 0
    loop: start=0, step=1, limit=4
    $region2: #{tpu_custom_call.1} parent=1 // loop_pre_header
      _
    $region3: #{tpu_custom_call.1} parent=1 // loop_header
      %s25 = sphi 0, %s29
      %p26 = scmp.ge.s32.totalorder %s25, 4
      %s35 = sphi 0, %s37
      %s38 = sphi 0, %s35
      %s39 = sphi 0, %s38
      %s55 = sphi 0, %s39
      %s59 = sphi 0, %s59
      %s61 = sphi 0, %s59
      %s62 = sphi 0, %s61
      %s76 = sphi 0, %s62
      %s80 = sphi 0, %s80
      %s82 = sphi 0, %s80
      %s83 = sphi 0, %s82
      %s97 = sphi 0, %s83
      %s101 = sphi 0, %s101
      %s103 = sphi 0, %s101
      %s104 = sphi 0, %s103
      %s118 = sphi 0, %s104
      %s122 = sphi 0, %s122
      %s124 = sphi 0, %s122
      %s125 = sphi 0, %s124
      %s139 = sphi 0, %s125
      %s143 = sphi 0, %s143
      %s145 = sphi 0, %s143
      %s146 = sphi 0, %s145
      %s160 = sphi 0, %s146
      %s164 = sphi 0, %s164
      %s166 = sphi 0, %s164
      %s167 = sphi 0, %s166
      %s181 = sphi 0, %s167
      %s185 = sphi 0, %s185
      %s187 = sphi 0, %s185
      %s188 = sphi 0, %s187
      %s202 = sphi 0, %s188
      %s208 = sphi 0, %s210
      %s211 = sphi 0, %s208
      %s212 = sphi 0, %s211
      %s228 = sphi 0, %s212
      %s232 = sphi 0, %s232
      %s234 = sphi 0, %s232
      %s235 = sphi 0, %s234
      %s249 = sphi 0, %s235
    $region4: #{tpu_custom_call.1} parent=1 // loop_header_branch
      %28 = sbr.rel (%p26) target = $region8
    $region5: #{tpu_custom_call.1} parent=1 // loop_body
      %s30 = ssub.s32 %s25, 1
      %s31 = ssub.s32 %s25, 2
      %s32 = sadd.s32 %s25, 1
      %s33 = ssub.s32 %s25, %s32
      %p34 = scmp.eq.s32.totalorder %s33, 0
      %s36 = sadd.s32 %s35, 1
      %s37 = scalar_select %p34, %s35, %s36
      %p40 = pneg %p34
      %p41 = scmp.eq.s32.totalorder %s25, 1
      %p42 = por %p40, %p41
      %p43 = scmp.ne.s32.totalorder %s35, %s38
      %p44 = scmp.eq.s32.totalorder %s25, 0
      %p45 = por %p43, %p44
      %p46 = scmp.ne.s32.totalorder %s35, %s38
      %p47 = scmp.eq.s32.totalorder %s30, 1
      %p48 = por %p46, %p47
      %p49 = scmp.ne.s32.totalorder %s38, %s39
      %p50 = scmp.eq.s32.totalorder %s30, 0
      %p51 = por %p49, %p50
      %p52 = scmp.ne.s32.totalorder %s38, %s39
      %p53 = scmp.eq.s32.totalorder %s31, 1
      %p54 = por %p52, %p53
      %p56 = scmp.ne.s32.totalorder %s39, %s55
      %p57 = scmp.eq.s32.totalorder %s31, 0
      %p58 = por %p56, %p57
      %s60 = sadd.s32 %s59, 1
      %p63 = scmp.eq.s32.totalorder %s25, 1
      %p64 = scmp.ne.s32.totalorder %s59, %s61
      %p65 = scmp.eq.s32.totalorder %s25, 0
      %p66 = por %p64, %p65
      %p67 = scmp.ne.s32.totalorder %s59, %s61
      %p68 = scmp.eq.s32.totalorder %s30, 1
      %p69 = por %p67, %p68
      %p70 = scmp.ne.s32.totalorder %s61, %s62
      %p71 = scmp.eq.s32.totalorder %s30, 0
      %p72 = por %p70, %p71
      %p73 = scmp.ne.s32.totalorder %s61, %s62
      %p74 = scmp.eq.s32.totalorder %s31, 1
      %p75 = por %p73, %p74
      %p77 = scmp.ne.s32.totalorder %s62, %s76
      %p78 = scmp.eq.s32.totalorder %s31, 0
      %p79 = por %p77, %p78
      %s81 = sadd.s32 %s80, 1
      %p84 = scmp.eq.s32.totalorder %s25, 1
      %p85 = scmp.ne.s32.totalorder %s80, %s82
      %p86 = scmp.eq.s32.totalorder %s25, 0
      %p87 = por %p85, %p86
      %p88 = scmp.ne.s32.totalorder %s80, %s82
      %p89 = scmp.eq.s32.totalorder %s30, 1
      %p90 = por %p88, %p89
      %p91 = scmp.ne.s32.totalorder %s82, %s83
      %p92 = scmp.eq.s32.totalorder %s30, 0
      %p93 = por %p91, %p92
      %p94 = scmp.ne.s32.totalorder %s82, %s83
      %p95 = scmp.eq.s32.totalorder %s31, 1
      %p96 = por %p94, %p95
      %p98 = scmp.ne.s32.totalorder %s83, %s97
      %p99 = scmp.eq.s32.totalorder %s31, 0
      %p100 = por %p98, %p99
      %s102 = sadd.s32 %s101, 1
      %p105 = scmp.eq.s32.totalorder %s25, 1
      %p106 = scmp.ne.s32.totalorder %s101, %s103
      %p107 = scmp.eq.s32.totalorder %s25, 0
      %p108 = por %p106, %p107
      %p109 = scmp.ne.s32.totalorder %s101, %s103
      %p110 = scmp.eq.s32.totalorder %s30, 1
      %p111 = por %p109, %p110
      %p112 = scmp.ne.s32.totalorder %s103, %s104
      %p113 = scmp.eq.s32.totalorder %s30, 0
      %p114 = por %p112, %p113
      %p115 = scmp.ne.s32.totalorder %s103, %s104
      %p116 = scmp.eq.s32.totalorder %s31, 1
      %p117 = por %p115, %p116
      %p119 = scmp.ne.s32.totalorder %s104, %s118
      %p120 = scmp.eq.s32.totalorder %s31, 0
      %p121 = por %p119, %p120
      %s123 = sadd.s32 %s122, 1
      %p126 = scmp.eq.s32.totalorder %s25, 1
      %p127 = scmp.ne.s32.totalorder %s122, %s124
      %p128 = scmp.eq.s32.totalorder %s25, 0
      %p129 = por %p127, %p128
      %p130 = scmp.ne.s32.totalorder %s122, %s124
      %p131 = scmp.eq.s32.totalorder %s30, 1
      %p132 = por %p130, %p131
      %p133 = scmp.ne.s32.totalorder %s124, %s125
      %p134 = scmp.eq.s32.totalorder %s30, 0
      %p135 = por %p133, %p134
      %p136 = scmp.ne.s32.totalorder %s124, %s125
      %p137 = scmp.eq.s32.totalorder %s31, 1
      %p138 = por %p136, %p137
      %p140 = scmp.ne.s32.totalorder %s125, %s139
      %p141 = scmp.eq.s32.totalorder %s31, 0
      %p142 = por %p140, %p141
      %s144 = sadd.s32 %s143, 1
      %p147 = scmp.eq.s32.totalorder %s25, 1
      %p148 = scmp.ne.s32.totalorder %s143, %s145
      %p149 = scmp.eq.s32.totalorder %s25, 0
      %p150 = por %p148, %p149
      %p151 = scmp.ne.s32.totalorder %s143, %s145
      %p152 = scmp.eq.s32.totalorder %s30, 1
      %p153 = por %p151, %p152
      %p154 = scmp.ne.s32.totalorder %s145, %s146
      %p155 = scmp.eq.s32.totalorder %s30, 0
      %p156 = por %p154, %p155
      %p157 = scmp.ne.s32.totalorder %s145, %s146
      %p158 = scmp.eq.s32.totalorder %s31, 1
      %p159 = por %p157, %p158
      %p161 = scmp.ne.s32.totalorder %s146, %s160
      %p162 = scmp.eq.s32.totalorder %s31, 0
      %p163 = por %p161, %p162
      %s165 = sadd.s32 %s164, 1
      %p168 = scmp.eq.s32.totalorder %s25, 1
      %p169 = scmp.ne.s32.totalorder %s164, %s166
      %p170 = scmp.eq.s32.totalorder %s25, 0
      %p171 = por %p169, %p170
      %p172 = scmp.ne.s32.totalorder %s164, %s166
      %p173 = scmp.eq.s32.totalorder %s30, 1
      %p174 = por %p172, %p173
      %p175 = scmp.ne.s32.totalorder %s166, %s167
      %p176 = scmp.eq.s32.totalorder %s30, 0
      %p177 = por %p175, %p176
      %p178 = scmp.ne.s32.totalorder %s166, %s167
      %p179 = scmp.eq.s32.totalorder %s31, 1
      %p180 = por %p178, %p179
      %p182 = scmp.ne.s32.totalorder %s167, %s181
      %p183 = scmp.eq.s32.totalorder %s31, 0
      %p184 = por %p182, %p183
      %s186 = sadd.s32 %s185, 1
      %p189 = scmp.eq.s32.totalorder %s25, 1
      %p190 = scmp.ne.s32.totalorder %s185, %s187
      %p191 = scmp.eq.s32.totalorder %s25, 0
      %p192 = por %p190, %p191
      %p193 = scmp.ne.s32.totalorder %s185, %s187
      %p194 = scmp.eq.s32.totalorder %s30, 1
      %p195 = por %p193, %p194
      %p196 = scmp.ne.s32.totalorder %s187, %s188
      %p197 = scmp.eq.s32.totalorder %s30, 0
      %p198 = por %p196, %p197
      %p199 = scmp.ne.s32.totalorder %s187, %s188
      %p200 = scmp.eq.s32.totalorder %s31, 1
      %p201 = por %p199, %p200
      %p203 = scmp.ne.s32.totalorder %s188, %s202
      %p204 = scmp.eq.s32.totalorder %s31, 0
      %p205 = por %p203, %p204
      %s206 = ssub.s32 %s25, %s32
      %p207 = scmp.eq.s32.totalorder %s206, 0
      %s209 = sadd.s32 %s208, 1
      %s210 = scalar_select %p207, %s208, %s209
      %p213 = pneg %p207
      %p214 = scmp.eq.s32.totalorder %s25, 1
      %p215 = por %p213, %p214
      %p216 = scmp.ne.s32.totalorder %s208, %s211
      %p217 = scmp.eq.s32.totalorder %s25, 0
      %p218 = por %p216, %p217
      %p219 = scmp.ne.s32.totalorder %s208, %s211
      %p220 = scmp.eq.s32.totalorder %s30, 1
      %p221 = por %p219, %p220
      %p222 = scmp.ne.s32.totalorder %s211, %s212
      %p223 = scmp.eq.s32.totalorder %s30, 0
      %p224 = por %p222, %p223
      %p225 = scmp.ne.s32.totalorder %s211, %s212
      %p226 = scmp.eq.s32.totalorder %s31, 1
      %p227 = por %p225, %p226
      %p229 = scmp.ne.s32.totalorder %s212, %s228
      %p230 = scmp.eq.s32.totalorder %s31, 0
      %p231 = por %p229, %p230
      %s233 = sadd.s32 %s232, 1
      %p236 = scmp.eq.s32.totalorder %s25, 1
      %p237 = scmp.ne.s32.totalorder %s232, %s234
      %p238 = scmp.eq.s32.totalorder %s25, 0
      %p239 = por %p237, %p238
      %p240 = scmp.ne.s32.totalorder %s232, %s234
      %p241 = scmp.eq.s32.totalorder %s30, 1
      %p242 = por %p240, %p241
      %p243 = scmp.ne.s32.totalorder %s234, %s235
      %p244 = scmp.eq.s32.totalorder %s30, 0
      %p245 = por %p243, %p244
      %p246 = scmp.ne.s32.totalorder %s234, %s235
      %p247 = scmp.eq.s32.totalorder %s31, 1
      %p248 = por %p246, %p247
      %p250 = scmp.ne.s32.totalorder %s235, %s249
      %p251 = scmp.eq.s32.totalorder %s31, 0
      %p252 = por %p250, %p251
      %p253 = scmp.le.s32.totalorder 1, %s25
      %p254 = scmp.lt.s32.totalorder %s25, 3
      %p255 = pnand %p253, %p254
      %p256 = pneg %p255
      // Predicated region
      $region9: #{tpu_custom_call.1} parent=5 // pred_check
        _
      $region10: #{tpu_custom_call.1} parent=5 // pred_check_branch
        %258 = sbr.rel (%p255) target = $region12
      $region11: #{tpu_custom_call.1} parent=5 // pred_region
        %s259 = ssub.s32 %s25, 1
        // Predicated region
        $region13: #{tpu_custom_call.1} parent=11 // pred_check
          %p260 = pneg %p72
        $region14: #{tpu_custom_call.1} parent=11 // pred_check_branch
          %262 = sbr.rel (%p260) target = $region16
        $region15: #{tpu_custom_call.1} parent=11 // pred_region
          %264 = vsyncadd [#allocation9], 0
          %s266 = sshll.u32 %s1, 4
          %s267 = int_to_ptr.hbm [resolvable:$true] %s266
          %s268 = sshll.u32 [#allocation8], 4
          %s269 = int_to_ptr.vmem [resolvable:$true] %s268
          %271 = dma.hbm_to_vmem [thread:$0]  %s267, 128, %s269, [#allocation9]
        $region16: #{tpu_custom_call.1} parent=11 // pred_fallthru
          _
        // Predicated region
        $region17: #{tpu_custom_call.1} parent=11 // pred_check
          %p272 = pneg %p93
        $region18: #{tpu_custom_call.1} parent=11 // pred_check_branch
          %274 = sbr.rel (%p272) target = $region20
        $region19: #{tpu_custom_call.1} parent=11 // pred_region
          %276 = vsyncadd [#allocation9], 0
          %s277 = sshll.u32 %s2, 4
          %s278 = int_to_ptr.hbm [resolvable:$true] %s277
          %s279 = sshll.u32 [#allocation10], 4
          %s280 = int_to_ptr.vmem [resolvable:$true] %s279
          %285 = dma.hbm_to_vmem [thread:$0]  %s278, 3072, %s280, [#allocation9], 192, 192, 12
        $region20: #{tpu_custom_call.1} parent=11 // pred_fallthru
          _
        // Predicated region
        $region21: #{tpu_custom_call.1} parent=11 // pred_check
          %p286 = pneg %p114
        $region22: #{tpu_custom_call.1} parent=11 // pred_check_branch
          %288 = sbr.rel (%p286) target = $region24
        $region23: #{tpu_custom_call.1} parent=11 // pred_region
          %290 = vsyncadd [#allocation12], 0
          %s291 = sshll.u32 %s3, 4
          %s292 = int_to_ptr.hbm [resolvable:$true] %s291
          %s293 = sshll.u32 [#allocation11], 4
          %s294 = int_to_ptr.vmem [resolvable:$true] %s293
          %299 = dma.hbm_to_vmem [thread:$0]  %s292, 6144, %s294, [#allocation12], 384, 384, 24
        $region24: #{tpu_custom_call.1} parent=11 // pred_fallthru
          _
        // Predicated region
        $region25: #{tpu_custom_call.1} parent=11 // pred_check
          %p300 = pneg %p135
        $region26: #{tpu_custom_call.1} parent=11 // pred_check_branch
          %302 = sbr.rel (%p300) target = $region28
        $region27: #{tpu_custom_call.1} parent=11 // pred_region
          _
        $region28: #{tpu_custom_call.1} parent=11 // pred_fallthru
          _
        // Predicated region
        $region29: #{tpu_custom_call.1} parent=11 // pred_check
          %p303 = pneg %p156
        $region30: #{tpu_custom_call.1} parent=11 // pred_check_branch
          %305 = sbr.rel (%p303) target = $region32
        $region31: #{tpu_custom_call.1} parent=11 // pred_region
          _
        $region32: #{tpu_custom_call.1} parent=11 // pred_fallthru
          _
        // Predicated region
        $region33: #{tpu_custom_call.1} parent=11 // pred_check
          %p306 = pneg %p177
        $region34: #{tpu_custom_call.1} parent=11 // pred_check_branch
          %308 = sbr.rel (%p306) target = $region36
        $region35: #{tpu_custom_call.1} parent=11 // pred_region
          %310 = vsyncadd [#allocation12], 0
          %s311 = sshll.u32 %s6, 4
          %s312 = int_to_ptr.hbm [resolvable:$true] %s311
          %s313 = sshll.u32 [#allocation13], 4
          %s314 = int_to_ptr.vmem [resolvable:$true] %s313
          %319 = dma.hbm_to_vmem [thread:$0]  %s312, 1024, %s314, [#allocation12], 64, 64, 4
        $region36: #{tpu_custom_call.1} parent=11 // pred_fallthru
          _
        // Predicated region
        $region37: #{tpu_custom_call.1} parent=11 // pred_check
          %p320 = pneg %p198
        $region38: #{tpu_custom_call.1} parent=11 // pred_check_branch
          %322 = sbr.rel (%p320) target = $region40
        $region39: #{tpu_custom_call.1} parent=11 // pred_region
          _
        $region40: #{tpu_custom_call.1} parent=11 // pred_fallthru
          _
      $region12: #{tpu_custom_call.1} parent=5 // pred_fallthru
        _
      %p323 = scmp.lt.s32.totalorder %s25, 2
      // Predicated region
      $region41: #{tpu_custom_call.1} parent=5 // pred_check
        %p324 = pneg %p323
      $region42: #{tpu_custom_call.1} parent=5 // pred_check_branch
        %326 = sbr.rel (%p324) target = $region44
      $region43: #{tpu_custom_call.1} parent=5 // pred_region
        // Predicated region
        $region45: #{tpu_custom_call.1} parent=43 // pred_check
          %p327 = pneg %p45
        $region46: #{tpu_custom_call.1} parent=43 // pred_check_branch
          %329 = sbr.rel (%p327) target = $region48
        $region47: #{tpu_custom_call.1} parent=43 // pred_region
          %s330 = sand.u32 %s35, 1
          %s331 = scalar_lea.sflag [#allocation6], %s330
          %s332 = sand.u32 %s35, 1
          %s333 = smul.addr %s332, 16
          %s334 = scalar_lea.vmem [#allocation5], %s333
          %s335 = smul.u32 4, %s25
          %337 = vsyncadd %s331, 0
          %s338 = smul.addr %s335, 4
          %s339 = scalar_lea.hbm %s0, %s338
          %s340 = sshll.u32 %s339, 4
          %s341 = int_to_ptr.hbm [resolvable:$true] %s340
          %s342 = sshll.u32 %s334, 4
          %s343 = int_to_ptr.vmem [resolvable:$true] %s342
          %348 = dma.hbm_to_vmem [thread:$0]  %s341, 256, %s343, %s331, 64, 64, 4
        $region48: #{tpu_custom_call.1} parent=43 // pred_fallthru
          _
      $region44: #{tpu_custom_call.1} parent=5 // pred_fallthru
        _
      %p349 = scmp.le.s32.totalorder 1, %s25
      %p350 = scmp.lt.s32.totalorder %s25, 3
      %p351 = pnand %p349, %p350
      %p352 = pneg %p351
      // Predicated region
      $region49: #{tpu_custom_call.1} parent=5 // pred_check
        _
      $region50: #{tpu_custom_call.1} parent=5 // pred_check_branch
        %354 = sbr.rel (%p351) target = $region52
      $region51: #{tpu_custom_call.1} parent=5 // pred_region
        %s355 = ssub.s32 %s25, 1
        %s356 = sand.u32 %s38, 1
        %s357 = scalar_lea.sflag [#allocation6], %s356
        %s358 = sand.u32 %s38, 1
        %s359 = smul.addr %s358, 16
        %s360 = scalar_lea.vmem [#allocation5], %s359
        // Predicated region
        $region53: #{tpu_custom_call.1} parent=51 // pred_check
          %p361 = pneg %p51
        $region54: #{tpu_custom_call.1} parent=51 // pred_check_branch
          %363 = sbr.rel (%p361) target = $region56
        $region55: #{tpu_custom_call.1} parent=51 // pred_region
          %365 = dma.done %s357, 256
        $region56: #{tpu_custom_call.1} parent=51 // pred_fallthru
          _
        // Predicated region
        $region57: #{tpu_custom_call.1} parent=51 // pred_check
          %p366 = pneg %p72
        $region58: #{tpu_custom_call.1} parent=51 // pred_check_branch
          %368 = sbr.rel (%p366) target = $region60
        $region59: #{tpu_custom_call.1} parent=51 // pred_region
          %370 = dma.done [#allocation9], 128
        $region60: #{tpu_custom_call.1} parent=51 // pred_fallthru
          _
        // Predicated region
        $region61: #{tpu_custom_call.1} parent=51 // pred_check
          %p371 = pneg %p93
        $region62: #{tpu_custom_call.1} parent=51 // pred_check_branch
          %373 = sbr.rel (%p371) target = $region64
        $region63: #{tpu_custom_call.1} parent=51 // pred_region
          %375 = dma.done [#allocation9], 3072
        $region64: #{tpu_custom_call.1} parent=51 // pred_fallthru
          _
        // Predicated region
        $region65: #{tpu_custom_call.1} parent=51 // pred_check
          %p376 = pneg %p114
        $region66: #{tpu_custom_call.1} parent=51 // pred_check_branch
          %378 = sbr.rel (%p376) target = $region68
        $region67: #{tpu_custom_call.1} parent=51 // pred_region
          %380 = dma.done [#allocation12], 6144
        $region68: #{tpu_custom_call.1} parent=51 // pred_fallthru
          _
        // Predicated region
        $region69: #{tpu_custom_call.1} parent=51 // pred_check
          %p381 = pneg %p177
        $region70: #{tpu_custom_call.1} parent=51 // pred_check_branch
          %383 = sbr.rel (%p381) target = $region72
        $region71: #{tpu_custom_call.1} parent=51 // pred_region
          %385 = dma.done [#allocation12], 1024
        $region72: #{tpu_custom_call.1} parent=51 // pred_fallthru
          _
        %s386 = sand.u32 %s38, 1
        %s387 = scalar_lea.sflag [#allocation6], %s386
        %s388 = sand.u32 %s38, 1
        %s389 = smul.addr %s388, 16
        %s390 = scalar_lea.vmem [#allocation5], %s389
        %p391 = pneg %p51
        %p392 = pneg %p48
        %p393 = pneg %p72
        %p394 = pneg %p69
        %p395 = pneg %p93
        %p396 = pneg %p90
        %p397 = pneg %p114
        %p398 = pneg %p111
        %p399 = pneg %p135
        %p400 = pneg %p132
        %p401 = pneg %p156
        %p402 = pneg %p153
        %p403 = pneg %p177
        %p404 = pneg %p174
        %p405 = pneg %p198
        %p406 = pneg %p195
        %p407 = pneg %p224
        %p408 = pneg %p221
        %s409 = sand.u32 %s211, 1
        %s410 = scalar_lea.sflag [#allocation7], %s409
        %s411 = sand.u32 %s211, 1
        %s412 = smul.addr %s411, 32
        %s413 = scalar_lea.vmem [#allocation14], %s412
        %p414 = pneg %p245
        %p415 = pneg %p242
        %s416 = smul.u32 4, %s30
        %s417 = smul.u32 4, %s30
        %p418 = scmp.eq.s32.totalorder %s30, 0
        // Predicated region
        $region73: #{tpu_custom_call.1} parent=51 // pred_check
          %p419 = pneg %p418
        $region74: #{tpu_custom_call.1} parent=51 // pred_check_branch
          %421 = sbr.rel (%p419) target = $region76
        $region75: #{tpu_custom_call.1} parent=51 // pred_region
          %v422 = vld [vmem:[#allocation8] sm:$0xff]
          %423 = vst [vmem:[#allocation2] sm:$0xff] %v422
        $region76: #{tpu_custom_call.1} parent=51 // pred_fallthru
          _
        %v424 = vld [vmem:[%s360] sm:$0xf]
        %v425 = vld [vmem:[%s360 + $0x4] sm:$0xf]
        %v426 = vld [vmem:[%s360 + $0x8] sm:$0xf]
        %v427 = vld [vmem:[%s360 + $0xc] sm:$0xf]
        %v428 = vld [vmem:[#allocation10] sm:$0xff]
        %v429 = vld [vmem:[#allocation10 + $0x8] sm:$0xf]
        %v430 = vld [vmem:[#allocation10 + $0xc] sm:$0xff]
        %v431 = vld [vmem:[#allocation10 + $0x14] sm:$0xf]
        %v432 = vld [vmem:[#allocation10 + $0x18] sm:$0xff]
        %v433 = vld [vmem:[#allocation10 + $0x20] sm:$0xf]
        %v434 = vld [vmem:[#allocation10 + $0x24] sm:$0xff]
        %v435 = vld [vmem:[#allocation10 + $0x2c] sm:$0xf]
        %v436 = vld [vmem:[#allocation10 + $0x30] sm:$0xff]
        %v437 = vld [vmem:[#allocation10 + $0x38] sm:$0xf]
        %v438 = vld [vmem:[#allocation10 + $0x3c] sm:$0xff]
        %v439 = vld [vmem:[#allocation10 + $0x44] sm:$0xf]
        %v440 = vld [vmem:[#allocation10 + $0x48] sm:$0xff]
        %v441 = vld [vmem:[#allocation10 + $0x50] sm:$0xf]
        %v442 = vld [vmem:[#allocation10 + $0x54] sm:$0xff]
        %v443 = vld [vmem:[#allocation10 + $0x5c] sm:$0xf]
        %v444 = vld [vmem:[#allocation10 + $0x60] sm:$0xff]
        %v445 = vld [vmem:[#allocation10 + $0x68] sm:$0xf]
        %v446 = vld [vmem:[#allocation10 + $0x6c] sm:$0xff]
        %v447 = vld [vmem:[#allocation10 + $0x74] sm:$0xf]
        %v448 = vld [vmem:[#allocation10 + $0x78] sm:$0xff]
        %v449 = vld [vmem:[#allocation10 + $0x80] sm:$0xf]
        %v450 = vld [vmem:[#allocation10 + $0x84] sm:$0xff]
        %v451 = vld [vmem:[#allocation10 + $0x8c] sm:$0xf]
        %v452 = vld [vmem:[#allocation10 + $0x90] sm:$0xff]
        %v453 = vld [vmem:[#allocation10 + $0x98] sm:$0xf]
        %v454 = vld [vmem:[#allocation10 + $0x9c] sm:$0xff]
        %v455 = vld [vmem:[#allocation10 + $0xa4] sm:$0xf]
        %v456 = vld [vmem:[#allocation10 + $0xa8] sm:$0xff]
        %v457 = vld [vmem:[#allocation10 + $0xb0] sm:$0xf]
        %v458 = vld [vmem:[#allocation10 + $0xb4] sm:$0xff]
        %v459 = vld [vmem:[#allocation10 + $0xbc] sm:$0xf]
        %v460 = vld [vmem:[%s4] sm:$0x7]
        %v462 = vperm.slane %v460, 0
        %v463 = vperm.slane %v460, 1
        %v464 = vperm.slane %v460, 2
        %v472 = vunpack.c.l.b16 %v424
        %v473 = vunpack.c.l.b16 %v425
        %v474 = vunpack.c.l.b16 %v426
        %v475 = vunpack.c.l.b16 %v427
        %v476 = vpack.c.b16 %v473, %v472
        %v477 = vpack.c.b16 %v475, %v474
        %v512 = vunpack.c.l.b16 %v428
        %v513 = vunpack.c.h.b16 %v428
        %v514 = vunpack.c.l.b16 %v429
        %v515 = vunpack.c.l.b16 %v430
        %v516 = vunpack.c.h.b16 %v430
        %v517 = vunpack.c.l.b16 %v431
        %v518 = vunpack.c.l.b16 %v432
        %v519 = vunpack.c.h.b16 %v432
        %v520 = vunpack.c.l.b16 %v433
        %v521 = vunpack.c.l.b16 %v434
        %v522 = vunpack.c.h.b16 %v434
        %v523 = vunpack.c.l.b16 %v435
        %v524 = vunpack.c.l.b16 %v436
        %v525 = vunpack.c.h.b16 %v436
        %v526 = vunpack.c.l.b16 %v437
        %v527 = vunpack.c.l.b16 %v438
        %v528 = vunpack.c.h.b16 %v438
        %v529 = vunpack.c.l.b16 %v439
        %v530 = vunpack.c.l.b16 %v440
        %v531 = vunpack.c.h.b16 %v440
        %v532 = vunpack.c.l.b16 %v441
        %v533 = vunpack.c.l.b16 %v442
        %v534 = vunpack.c.h.b16 %v442
        %v535 = vunpack.c.l.b16 %v443
        %v536 = vunpack.c.l.b16 %v444
        %v537 = vunpack.c.h.b16 %v444
        %v538 = vunpack.c.l.b16 %v445
        %v539 = vunpack.c.l.b16 %v446
        %v540 = vunpack.c.h.b16 %v446
        %v541 = vunpack.c.l.b16 %v447
        %v542 = vunpack.c.l.b16 %v448
        %v543 = vunpack.c.h.b16 %v448
        %v544 = vunpack.c.l.b16 %v449
        %v545 = vunpack.c.l.b16 %v450
        %v546 = vunpack.c.h.b16 %v450
        %v547 = vunpack.c.l.b16 %v451
        %v548 = vunpack.c.l.b16 %v452
        %v549 = vunpack.c.h.b16 %v452
        %v550 = vunpack.c.l.b16 %v453
        %v551 = vunpack.c.l.b16 %v454
        %v552 = vunpack.c.h.b16 %v454
        %v553 = vunpack.c.l.b16 %v455
        %v554 = vunpack.c.l.b16 %v456
        %v555 = vunpack.c.h.b16 %v456
        %v556 = vunpack.c.l.b16 %v457
        %v557 = vunpack.c.l.b16 %v458
        %v558 = vunpack.c.h.b16 %v458
        %v559 = vunpack.c.l.b16 %v459
        %v560 = vpack.c.b16 %v515, %v512
        %v561 = vpack.c.b16 %v516, %v513
        %v562 = vpack.c.b16 %v517, %v514
        %v563 = vpack.c.b16 %v521, %v518
        %v564 = vpack.c.b16 %v522, %v519
        %v565 = vpack.c.b16 %v523, %v520
        %v566 = vpack.c.b16 %v527, %v524
        %v567 = vpack.c.b16 %v528, %v525
        %v568 = vpack.c.b16 %v529, %v526
        %v569 = vpack.c.b16 %v533, %v530
        %v570 = vpack.c.b16 %v534, %v531
        %v571 = vpack.c.b16 %v535, %v532
        %v572 = vpack.c.b16 %v539, %v536
        %v573 = vpack.c.b16 %v540, %v537
        %v574 = vpack.c.b16 %v541, %v538
        %v575 = vpack.c.b16 %v545, %v542
        %v576 = vpack.c.b16 %v546, %v543
        %v577 = vpack.c.b16 %v547, %v544
        %v578 = vpack.c.b16 %v551, %v548
        %v579 = vpack.c.b16 %v552, %v549
        %v580 = vpack.c.b16 %v553, %v550
        %v581 = vpack.c.b16 %v557, %v554
        %v582 = vpack.c.b16 %v558, %v555
        %v583 = vpack.c.b16 %v559, %v556
        %608 = vmatpush.bf16.msra.mxu0 %v581
        %609 = vmatpush.bf16.msra.mxu0 %v578
        %610 = vmatpush.bf16.msra.mxu0 %v575
        %611 = vmatpush.bf16.msra.mxu0 %v572
        %612 = vmatpush.bf16.msra.mxu0 %v569
        %613 = vmatpush.bf16.msra.mxu0 %v566
        %614 = vmatpush.bf16.msra.mxu0 %v563
        %615 = vmatpush.bf16.msra.mxu0 %v560
        %616 = vmatmul.bf16.gmra.mxu0 %v476
        %v617 = vpop.f32.mrf.mxu0
        %v618 = vadd.f32 %v462, %v617
        %v619 = vpop.f32.mrf.mxu0
        %v620 = vadd.f32 %v462, %v619
        %621 = vmatmul.bf16.gmra.mxu0 %v477
        %v622 = vpop.f32.mrf.mxu0
        %v623 = vadd.f32 %v462, %v622
        %v624 = vpop.f32.mrf.mxu0
        %v625 = vadd.f32 %v462, %v624
        %626 = vdwg.mxu0
        %627 = vmatpush.bf16.msra.mxu0 %v582
        %628 = vmatpush.bf16.msra.mxu0 %v579
        %629 = vmatpush.bf16.msra.mxu0 %v576
        %630 = vmatpush.bf16.msra.mxu0 %v573
        %631 = vmatpush.bf16.msra.mxu0 %v570
        %632 = vmatpush.bf16.msra.mxu0 %v567
        %633 = vmatpush.bf16.msra.mxu0 %v564
        %634 = vmatpush.bf16.msra.mxu0 %v561
        %635 = vmatmul.bf16.gmra.mxu0 %v476
        %v636 = vpop.f32.mrf.mxu0
        %v637 = vadd.f32 %v463, %v636
        %v638 = vpop.f32.mrf.mxu0
        %v639 = vadd.f32 %v463, %v638
        %640 = vmatmul.bf16.gmra.mxu0 %v477
        %v641 = vpop.f32.mrf.mxu0
        %v642 = vadd.f32 %v463, %v641
        %v643 = vpop.f32.mrf.mxu0
        %v644 = vadd.f32 %v463, %v643
        %645 = vdwg.mxu0
        %646 = vmatpush.bf16.msra.mxu0 %v583
        %647 = vmatpush.bf16.msra.mxu0 %v580
        %648 = vmatpush.bf16.msra.mxu0 %v577
        %649 = vmatpush.bf16.msra.mxu0 %v574
        %650 = vmatpush.bf16.msra.mxu0 %v571
        %651 = vmatpush.bf16.msra.mxu0 %v568
        %652 = vmatpush.bf16.msra.mxu0 %v565
        %653 = vmatpush.bf16.msra.mxu0 %v562
        %654 = vmatmul.bf16.gmra.mxu0 %v476
        %v655 = vpop.f32.mrf.mxu0
        %v656 = vadd.f32 %v464, %v655
        %v657 = vpop.f32.mrf.mxu0
        %v658 = vadd.f32 %v464, %v657
        %659 = vmatmul.bf16.gmra.mxu0 %v477
        %v660 = vpop.f32.mrf.mxu0
        %v661 = vadd.f32 %v464, %v660
        %v662 = vpop.f32.mrf.mxu0
        %v663 = vadd.f32 %v464, %v662
        %664 = vdwg.mxu0
        %665 = vst [vmem:[#allocation3] sm:$0xff] %v618
        %666 = vst [vmem:[#allocation3 + $0x8] sm:$0xff] %v637
        %667 = vst [vmem:[#allocation3 + $0x10] sm:$0xff] %v656
        %668 = vst [vmem:[#allocation3 + $0x18] sm:$0xff] %v620
        %669 = vst [vmem:[#allocation3 + $0x20] sm:$0xff] %v639
        %670 = vst [vmem:[#allocation3 + $0x28] sm:$0xff] %v658
        %671 = vst [vmem:[#allocation3 + $0x30] sm:$0xff] %v623
        %672 = vst [vmem:[#allocation3 + $0x38] sm:$0xff] %v642
        %673 = vst [vmem:[#allocation3 + $0x40] sm:$0xff] %v661
        %674 = vst [vmem:[#allocation3 + $0x48] sm:$0xff] %v625
        %675 = vst [vmem:[#allocation3 + $0x50] sm:$0xff] %v644
        %676 = vst [vmem:[#allocation3 + $0x58] sm:$0xff] %v663
        %v677 = vld [vmem:[#allocation11] sm:$0xff]
        %v678 = vld [vmem:[#allocation11 + $0x8] sm:$0xff]
        %v679 = vld [vmem:[#allocation11 + $0x10] sm:$0xff]
        %v680 = vld [vmem:[#allocation11 + $0x18] sm:$0xff]
        %v681 = vld [vmem:[#allocation11 + $0x20] sm:$0xff]
        %v682 = vld [vmem:[#allocation11 + $0x28] sm:$0xff]
        %v683 = vld [vmem:[#allocation11 + $0x30] sm:$0xff]
        %v684 = vld [vmem:[#allocation11 + $0x38] sm:$0xff]
        %v685 = vld [vmem:[#allocation11 + $0x40] sm:$0xff]
        %v686 = vld [vmem:[#allocation11 + $0x48] sm:$0xff]
        %v687 = vld [vmem:[#allocation11 + $0x50] sm:$0xff]
        %v688 = vld [vmem:[#allocation11 + $0x58] sm:$0xff]
        %v689 = vld [vmem:[#allocation11 + $0x60] sm:$0xff]
        %v690 = vld [vmem:[#allocation11 + $0x68] sm:$0xff]
        %v691 = vld [vmem:[#allocation11 + $0x70] sm:$0xff]
        %v692 = vld [vmem:[#allocation11 + $0x78] sm:$0xff]
        %v693 = vld [vmem:[#allocation11 + $0x80] sm:$0xff]
        %v694 = vld [vmem:[#allocation11 + $0x88] sm:$0xff]
        %v695 = vld [vmem:[#allocation11 + $0x90] sm:$0xff]
        %v696 = vld [vmem:[#allocation11 + $0x98] sm:$0xff]
        %v697 = vld [vmem:[#allocation11 + $0xa0] sm:$0xff]
        %v698 = vld [vmem:[#allocation11 + $0xa8] sm:$0xff]
        %v699 = vld [vmem:[#allocation11 + $0xb0] sm:$0xff]
        %v700 = vld [vmem:[#allocation11 + $0xb8] sm:$0xff]
        %v701 = vld [vmem:[#allocation11 + $0xc0] sm:$0xff]
        %v702 = vld [vmem:[#allocation11 + $0xc8] sm:$0xff]
        %v703 = vld [vmem:[#allocation11 + $0xd0] sm:$0xff]
        %v704 = vld [vmem:[#allocation11 + $0xd8] sm:$0xff]
        %v705 = vld [vmem:[#allocation11 + $0xe0] sm:$0xff]
        %v706 = vld [vmem:[#allocation11 + $0xe8] sm:$0xff]
        %v707 = vld [vmem:[#allocation11 + $0xf0] sm:$0xff]
        %v708 = vld [vmem:[#allocation11 + $0xf8] sm:$0xff]
        %v709 = vld [vmem:[#allocation11 + $0x100] sm:$0xff]
        %v710 = vld [vmem:[#allocation11 + $0x108] sm:$0xff]
        %v711 = vld [vmem:[#allocation11 + $0x110] sm:$0xff]
        %v712 = vld [vmem:[#allocation11 + $0x118] sm:$0xff]
        %v713 = vld [vmem:[#allocation11 + $0x120] sm:$0xff]
        %v714 = vld [vmem:[#allocation11 + $0x128] sm:$0xff]
        %v715 = vld [vmem:[#allocation11 + $0x130] sm:$0xff]
        %v716 = vld [vmem:[#allocation11 + $0x138] sm:$0xff]
        %v717 = vld [vmem:[#allocation11 + $0x140] sm:$0xff]
        %v718 = vld [vmem:[#allocation11 + $0x148] sm:$0xff]
        %v719 = vld [vmem:[#allocation11 + $0x150] sm:$0xff]
        %v720 = vld [vmem:[#allocation11 + $0x158] sm:$0xff]
        %v721 = vld [vmem:[#allocation11 + $0x160] sm:$0xff]
        %v722 = vld [vmem:[#allocation11 + $0x168] sm:$0xff]
        %v723 = vld [vmem:[#allocation11 + $0x170] sm:$0xff]
        %v724 = vld [vmem:[#allocation11 + $0x178] sm:$0xff]
        %v725 = vld [vmem:[%s5] sm:$0x1]
        %v727 = vperm.slane %v725, 0
        %v729 = vld [vmem:[#allocation2] sm:$0xff]
        %v730 = vld [vmem:[#allocation3] sm:$0xff]
        %v731 = vld [vmem:[#allocation3 + $0x8] sm:$0xff]
        %v732 = vld [vmem:[#allocation3 + $0x10] sm:$0xff]
        %733 = vmatpush.msra.mxu0 %v722
        %734 = vmatpush.msra.mxu0 %v719
        %735 = vmatpush.msra.mxu0 %v716
        %736 = vmatpush.msra.mxu0 %v713
        %737 = vmatpush.msra.mxu0 %v710
        %738 = vmatpush.msra.mxu0 %v707
        %739 = vmatpush.msra.mxu0 %v704
        %740 = vmatpush.msra.mxu0 %v701
        %741 = vmatpush.msra.mxu0 %v698
        %742 = vmatpush.msra.mxu0 %v695
        %743 = vmatpush.msra.mxu0 %v692
        %744 = vmatpush.msra.mxu0 %v689
        %745 = vmatpush.msra.mxu0 %v686
        %746 = vmatpush.msra.mxu0 %v683
        %747 = vmatpush.msra.mxu0 %v680
        %748 = vmatpush.msra.mxu0 %v677
        %749 = vmatmul.f32.gmra.mxu0 %v729
        %v750 = vpop.f32.mrf.mxu0
        %v751 = vadd.f32 0.0, %v750
        %752 = vdwg.mxu0
        %753 = vmatpush.msra.mxu0 %v723
        %754 = vmatpush.msra.mxu0 %v720
        %755 = vmatpush.msra.mxu0 %v717
        %756 = vmatpush.msra.mxu0 %v714
        %757 = vmatpush.msra.mxu0 %v711
        %758 = vmatpush.msra.mxu0 %v708
        %759 = vmatpush.msra.mxu0 %v705
        %760 = vmatpush.msra.mxu0 %v702
        %761 = vmatpush.msra.mxu0 %v699
        %762 = vmatpush.msra.mxu0 %v696
        %763 = vmatpush.msra.mxu0 %v693
        %764 = vmatpush.msra.mxu0 %v690
        %765 = vmatpush.msra.mxu0 %v687
        %766 = vmatpush.msra.mxu0 %v684
        %767 = vmatpush.msra.mxu0 %v681
        %768 = vmatpush.msra.mxu0 %v678
        %769 = vmatmul.f32.gmra.mxu0 %v729
        %v770 = vpop.f32.mrf.mxu0
        %v771 = vadd.f32 0.0, %v770
        %772 = vdwg.mxu0
        %773 = vmatpush.msra.mxu0 %v724
        %774 = vmatpush.msra.mxu0 %v721
        %775 = vmatpush.msra.mxu0 %v718
        %776 = vmatpush.msra.mxu0 %v715
        %777 = vmatpush.msra.mxu0 %v712
        %778 = vmatpush.msra.mxu0 %v709
        %779 = vmatpush.msra.mxu0 %v706
        %780 = vmatpush.msra.mxu0 %v703
        %781 = vmatpush.msra.mxu0 %v700
        %782 = vmatpush.msra.mxu0 %v697
        %783 = vmatpush.msra.mxu0 %v694
        %784 = vmatpush.msra.mxu0 %v691
        %785 = vmatpush.msra.mxu0 %v688
        %786 = vmatpush.msra.mxu0 %v685
        %787 = vmatpush.msra.mxu0 %v682
        %788 = vmatpush.msra.mxu0 %v679
        %789 = vmatmul.f32.gmra.mxu0 %v729
        %v790 = vpop.f32.mrf.mxu0
        %v791 = vadd.f32 0.0, %v790
        %792 = vdwg.mxu0
        %v793 = vadd.f32 %v730, %v751
        %v794 = vadd.f32 %v731, %v771
        %v795 = vxor.u32 %v793, 2147483648
        %v796 = vxor.u32 %v794, 2147483648
        %v797 = vmul.f32 %v795, 1.442695
        %v798 = vpow.pop %v797
        %v799 = vmul.f32 %v796, 1.442695
        %v800 = vpow.pop %v799
        %v801 = vadd.f32 %v798, 1.0
        %v802 = vadd.f32 %v800, 1.0
        %v803 = vrcp.pop %v801
        %v804 = vmul.f32 %v801, %v803
        %v805 = vsub.f32 1.0, %v804
        %v806 = vmul.f32 %v803, %v805
        %v807 = vadd.f32 %v803, %v806
        %vm808 = vweird.f32 %v801
        %vm809 = vweird.f32 %v803
        %vm810 = vmor %vm808, %vm809
        %v811 = vsel %vm810, %v803, %v807
        %v812 = vand.u32 2147483647, %v801
        %vm813 = vcmp.eq.f32.partialorder %v812, 8.507059e+37
        %v814 = vand.u32 %v801, 2147483648
        %v815 = vor.u32 1.1754944e-38, %v814
        %v816 = vsel %vm813, %v815, %v811
        %v817 = vmul.f32 1.0, %v816
        %v818 = vrcp.pop %v802
        %v819 = vmul.f32 %v802, %v818
        %v820 = vsub.f32 1.0, %v819
        %v821 = vmul.f32 %v818, %v820
        %v822 = vadd.f32 %v818, %v821
        %vm823 = vweird.f32 %v802
        %vm824 = vweird.f32 %v818
        %vm825 = vmor %vm823, %vm824
        %v826 = vsel %vm825, %v818, %v822
        %v827 = vand.u32 2147483647, %v802
        %vm828 = vcmp.eq.f32.partialorder %v827, 8.507059e+37
        %v829 = vand.u32 %v802, 2147483648
        %v830 = vor.u32 1.1754944e-38, %v829
        %v831 = vsel %vm828, %v830, %v826
        %v832 = vmul.f32 1.0, %v831
        %v833 = vadd.f32 %v791, %v727
        %v834 = vmul.f32 %v817, %v833
        %v835 = vadd.f32 %v732, %v834
        %v836 = vtanh.pop %v835
        %v837 = vsub.f32 1.0, %v832
        %v838 = vmul.f32 %v837, %v836
        %v839 = vmul.f32 %v832, %v729
        %v840 = vadd.f32 %v838, %v839
        %841 = vst [vmem:[#allocation4] sm:$0xff] %v840
        %v842 = vld [vmem:[#allocation3 + $0x18] sm:$0xff]
        %v843 = vld [vmem:[#allocation3 + $0x20] sm:$0xff]
        %v844 = vld [vmem:[#allocation3 + $0x28] sm:$0xff]
        %845 = vmatpush.msra.mxu0 %v722
        %846 = vmatpush.msra.mxu0 %v719
        %847 = vmatpush.msra.mxu0 %v716
        %848 = vmatpush.msra.mxu0 %v713
        %849 = vmatpush.msra.mxu0 %v710
        %850 = vmatpush.msra.mxu0 %v707
        %851 = vmatpush.msra.mxu0 %v704
        %852 = vmatpush.msra.mxu0 %v701
        %853 = vmatpush.msra.mxu0 %v698
        %854 = vmatpush.msra.mxu0 %v695
        %855 = vmatpush.msra.mxu0 %v692
        %856 = vmatpush.msra.mxu0 %v689
        %857 = vmatpush.msra.mxu0 %v686
        %858 = vmatpush.msra.mxu0 %v683
        %859 = vmatpush.msra.mxu0 %v680
        %860 = vmatpush.msra.mxu0 %v677
        %861 = vmatmul.f32.gmra.mxu0 %v840
        %v862 = vpop.f32.mrf.mxu0
        %v863 = vadd.f32 0.0, %v862
        %864 = vdwg.mxu0
        %865 = vmatpush.msra.mxu0 %v723
        %866 = vmatpush.msra.mxu0 %v720
        %867 = vmatpush.msra.mxu0 %v717
        %868 = vmatpush.msra.mxu0 %v714
        %869 = vmatpush.msra.mxu0 %v711
        %870 = vmatpush.msra.mxu0 %v708
        %871 = vmatpush.msra.mxu0 %v705
        %872 = vmatpush.msra.mxu0 %v702
        %873 = vmatpush.msra.mxu0 %v699
        %874 = vmatpush.msra.mxu0 %v696
        %875 = vmatpush.msra.mxu0 %v693
        %876 = vmatpush.msra.mxu0 %v690
        %877 = vmatpush.msra.mxu0 %v687
        %878 = vmatpush.msra.mxu0 %v684
        %879 = vmatpush.msra.mxu0 %v681
        %880 = vmatpush.msra.mxu0 %v678
        %881 = vmatmul.f32.gmra.mxu0 %v840
        %v882 = vpop.f32.mrf.mxu0
        %v883 = vadd.f32 0.0, %v882
        %884 = vdwg.mxu0
        %885 = vmatpush.msra.mxu0 %v724
        %886 = vmatpush.msra.mxu0 %v721
        %887 = vmatpush.msra.mxu0 %v718
        %888 = vmatpush.msra.mxu0 %v715
        %889 = vmatpush.msra.mxu0 %v712
        %890 = vmatpush.msra.mxu0 %v709
        %891 = vmatpush.msra.mxu0 %v706
        %892 = vmatpush.msra.mxu0 %v703
        %893 = vmatpush.msra.mxu0 %v700
        %894 = vmatpush.msra.mxu0 %v697
        %895 = vmatpush.msra.mxu0 %v694
        %896 = vmatpush.msra.mxu0 %v691
        %897 = vmatpush.msra.mxu0 %v688
        %898 = vmatpush.msra.mxu0 %v685
        %899 = vmatpush.msra.mxu0 %v682
        %900 = vmatpush.msra.mxu0 %v679
        %901 = vmatmul.f32.gmra.mxu0 %v840
        %v902 = vpop.f32.mrf.mxu0
        %v903 = vadd.f32 0.0, %v902
        %904 = vdwg.mxu0
        %v905 = vadd.f32 %v842, %v863
        %v906 = vadd.f32 %v843, %v883
        %v907 = vxor.u32 %v905, 2147483648
        %v908 = vxor.u32 %v906, 2147483648
        %v909 = vmul.f32 %v907, 1.442695
        %v910 = vpow.pop %v909
        %v911 = vmul.f32 %v908, 1.442695
        %v912 = vpow.pop %v911
        %v913 = vadd.f32 %v910, 1.0
        %v914 = vadd.f32 %v912, 1.0
        %v915 = vrcp.pop %v913
        %v916 = vmul.f32 %v913, %v915
        %v917 = vsub.f32 1.0, %v916
        %v918 = vmul.f32 %v915, %v917
        %v919 = vadd.f32 %v915, %v918
        %vm920 = vweird.f32 %v913
        %vm921 = vweird.f32 %v915
        %vm922 = vmor %vm920, %vm921
        %v923 = vsel %vm922, %v915, %v919
        %v924 = vand.u32 2147483647, %v913
        %vm925 = vcmp.eq.f32.partialorder %v924, 8.507059e+37
        %v926 = vand.u32 %v913, 2147483648
        %v927 = vor.u32 1.1754944e-38, %v926
        %v928 = vsel %vm925, %v927, %v923
        %v929 = vmul.f32 1.0, %v928
        %v930 = vrcp.pop %v914
        %v931 = vmul.f32 %v914, %v930
        %v932 = vsub.f32 1.0, %v931
        %v933 = vmul.f32 %v930, %v932
        %v934 = vadd.f32 %v930, %v933
        %vm935 = vweird.f32 %v914
        %vm936 = vweird.f32 %v930
        %vm937 = vmor %vm935, %vm936
        %v938 = vsel %vm937, %v930, %v934
        %v939 = vand.u32 2147483647, %v914
        %vm940 = vcmp.eq.f32.partialorder %v939, 8.507059e+37
        %v941 = vand.u32 %v914, 2147483648
        %v942 = vor.u32 1.1754944e-38, %v941
        %v943 = vsel %vm940, %v942, %v938
        %v944 = vmul.f32 1.0, %v943
        %v945 = vadd.f32 %v903, %v727
        %v946 = vmul.f32 %v929, %v945
        %v947 = vadd.f32 %v844, %v946
        %v948 = vtanh.pop %v947
        %v949 = vsub.f32 1.0, %v944
        %v950 = vmul.f32 %v949, %v948
        %v951 = vmul.f32 %v944, %v840
        %v952 = vadd.f32 %v950, %v951
        %953 = vst [vmem:[#allocation4 + $0x8] sm:$0xff] %v952
        %v954 = vld [vmem:[#allocation3 + $0x30] sm:$0xff]
        %v955 = vld [vmem:[#allocation3 + $0x38] sm:$0xff]
        %v956 = vld [vmem:[#allocation3 + $0x40] sm:$0xff]
        %957 = vmatpush.msra.mxu0 %v722
        %958 = vmatpush.msra.mxu0 %v719
        %959 = vmatpush.msra.mxu0 %v716
        %960 = vmatpush.msra.mxu0 %v713
        %961 = vmatpush.msra.mxu0 %v710
        %962 = vmatpush.msra.mxu0 %v707
        %963 = vmatpush.msra.mxu0 %v704
        %964 = vmatpush.msra.mxu0 %v701
        %965 = vmatpush.msra.mxu0 %v698
        %966 = vmatpush.msra.mxu0 %v695
        %967 = vmatpush.msra.mxu0 %v692
        %968 = vmatpush.msra.mxu0 %v689
        %969 = vmatpush.msra.mxu0 %v686
        %970 = vmatpush.msra.mxu0 %v683
        %971 = vmatpush.msra.mxu0 %v680
        %972 = vmatpush.msra.mxu0 %v677
        %973 = vmatmul.f32.gmra.mxu0 %v952
        %v974 = vpop.f32.mrf.mxu0
        %v975 = vadd.f32 0.0, %v974
        %976 = vdwg.mxu0
        %977 = vmatpush.msra.mxu0 %v723
        %978 = vmatpush.msra.mxu0 %v720
        %979 = vmatpush.msra.mxu0 %v717
        %980 = vmatpush.msra.mxu0 %v714
        %981 = vmatpush.msra.mxu0 %v711
        %982 = vmatpush.msra.mxu0 %v708
        %983 = vmatpush.msra.mxu0 %v705
        %984 = vmatpush.msra.mxu0 %v702
        %985 = vmatpush.msra.mxu0 %v699
        %986 = vmatpush.msra.mxu0 %v696
        %987 = vmatpush.msra.mxu0 %v693
        %988 = vmatpush.msra.mxu0 %v690
        %989 = vmatpush.msra.mxu0 %v687
        %990 = vmatpush.msra.mxu0 %v684
        %991 = vmatpush.msra.mxu0 %v681
        %992 = vmatpush.msra.mxu0 %v678
        %993 = vmatmul.f32.gmra.mxu0 %v952
        %v994 = vpop.f32.mrf.mxu0
        %v995 = vadd.f32 0.0, %v994
        %996 = vdwg.mxu0
        %997 = vmatpush.msra.mxu0 %v724
        %998 = vmatpush.msra.mxu0 %v721
        %999 = vmatpush.msra.mxu0 %v718
        %1000 = vmatpush.msra.mxu0 %v715
        %1001 = vmatpush.msra.mxu0 %v712
        %1002 = vmatpush.msra.mxu0 %v709
        %1003 = vmatpush.msra.mxu0 %v706
        %1004 = vmatpush.msra.mxu0 %v703
        %1005 = vmatpush.msra.mxu0 %v700
        %1006 = vmatpush.msra.mxu0 %v697
        %1007 = vmatpush.msra.mxu0 %v694
        %1008 = vmatpush.msra.mxu0 %v691
        %1009 = vmatpush.msra.mxu0 %v688
        %1010 = vmatpush.msra.mxu0 %v685
        %1011 = vmatpush.msra.mxu0 %v682
        %1012 = vmatpush.msra.mxu0 %v679
        %1013 = vmatmul.f32.gmra.mxu0 %v952
        %v1014 = vpop.f32.mrf.mxu0
        %v1015 = vadd.f32 0.0, %v1014
        %1016 = vdwg.mxu0
        %v1017 = vadd.f32 %v954, %v975
        %v1018 = vadd.f32 %v955, %v995
        %v1019 = vxor.u32 %v1017, 2147483648
        %v1020 = vxor.u32 %v1018, 2147483648
        %v1021 = vmul.f32 %v1019, 1.442695
        %v1022 = vpow.pop %v1021
        %v1023 = vmul.f32 %v1020, 1.442695
        %v1024 = vpow.pop %v1023
        %v1025 = vadd.f32 %v1022, 1.0
        %v1026 = vadd.f32 %v1024, 1.0
        %v1027 = vrcp.pop %v1025
        %v1028 = vmul.f32 %v1025, %v1027
        %v1029 = vsub.f32 1.0, %v1028
        %v1030 = vmul.f32 %v1027, %v1029
        %v1031 = vadd.f32 %v1027, %v1030
        %vm1032 = vweird.f32 %v1025
        %vm1033 = vweird.f32 %v1027
        %vm1034 = vmor %vm1032, %vm1033
        %v1035 = vsel %vm1034, %v1027, %v1031
        %v1036 = vand.u32 2147483647, %v1025
        %vm1037 = vcmp.eq.f32.partialorder %v1036, 8.507059e+37
        %v1038 = vand.u32 %v1025, 2147483648
        %v1039 = vor.u32 1.1754944e-38, %v1038
        %v1040 = vsel %vm1037, %v1039, %v1035
        %v1041 = vmul.f32 1.0, %v1040
        %v1042 = vrcp.pop %v1026
        %v1043 = vmul.f32 %v1026, %v1042
        %v1044 = vsub.f32 1.0, %v1043
        %v1045 = vmul.f32 %v1042, %v1044
        %v1046 = vadd.f32 %v1042, %v1045
        %vm1047 = vweird.f32 %v1026
        %vm1048 = vweird.f32 %v1042
        %vm1049 = vmor %vm1047, %vm1048
        %v1050 = vsel %vm1049, %v1042, %v1046
        %v1051 = vand.u32 2147483647, %v1026
        %vm1052 = vcmp.eq.f32.partialorder %v1051, 8.507059e+37
        %v1053 = vand.u32 %v1026, 2147483648
        %v1054 = vor.u32 1.1754944e-38, %v1053
        %v1055 = vsel %vm1052, %v1054, %v1050
        %v1056 = vmul.f32 1.0, %v1055
        %v1057 = vadd.f32 %v1015, %v727
        %v1058 = vmul.f32 %v1041, %v1057
        %v1059 = vadd.f32 %v956, %v1058
        %v1060 = vtanh.pop %v1059
        %v1061 = vsub.f32 1.0, %v1056
        %v1062 = vmul.f32 %v1061, %v1060
        %v1063 = vmul.f32 %v1056, %v952
        %v1064 = vadd.f32 %v1062, %v1063
        %1065 = vst [vmem:[#allocation4 + $0x10] sm:$0xff] %v1064
        %v1066 = vld [vmem:[#allocation3 + $0x48] sm:$0xff]
        %v1067 = vld [vmem:[#allocation3 + $0x50] sm:$0xff]
        %v1068 = vld [vmem:[#allocation3 + $0x58] sm:$0xff]
        %1069 = vmatpush.msra.mxu0 %v722
        %1070 = vmatpush.msra.mxu0 %v719
        %1071 = vmatpush.msra.mxu0 %v716
        %1072 = vmatpush.msra.mxu0 %v713
        %1073 = vmatpush.msra.mxu0 %v710
        %1074 = vmatpush.msra.mxu0 %v707
        %1075 = vmatpush.msra.mxu0 %v704
        %1076 = vmatpush.msra.mxu0 %v701
        %1077 = vmatpush.msra.mxu0 %v698
        %1078 = vmatpush.msra.mxu0 %v695
        %1079 = vmatpush.msra.mxu0 %v692
        %1080 = vmatpush.msra.mxu0 %v689
        %1081 = vmatpush.msra.mxu0 %v686
        %1082 = vmatpush.msra.mxu0 %v683
        %1083 = vmatpush.msra.mxu0 %v680
        %1084 = vmatpush.msra.mxu0 %v677
        %1085 = vmatmul.f32.gmra.mxu0 %v1064
        %v1086 = vpop.f32.mrf.mxu0
        %v1087 = vadd.f32 0.0, %v1086
        %1088 = vdwg.mxu0
        %1089 = vmatpush.msra.mxu0 %v723
        %1090 = vmatpush.msra.mxu0 %v720
        %1091 = vmatpush.msra.mxu0 %v717
        %1092 = vmatpush.msra.mxu0 %v714
        %1093 = vmatpush.msra.mxu0 %v711
        %1094 = vmatpush.msra.mxu0 %v708
        %1095 = vmatpush.msra.mxu0 %v705
        %1096 = vmatpush.msra.mxu0 %v702
        %1097 = vmatpush.msra.mxu0 %v699
        %1098 = vmatpush.msra.mxu0 %v696
        %1099 = vmatpush.msra.mxu0 %v693
        %1100 = vmatpush.msra.mxu0 %v690
        %1101 = vmatpush.msra.mxu0 %v687
        %1102 = vmatpush.msra.mxu0 %v684
        %1103 = vmatpush.msra.mxu0 %v681
        %1104 = vmatpush.msra.mxu0 %v678
        %1105 = vmatmul.f32.gmra.mxu0 %v1064
        %v1106 = vpop.f32.mrf.mxu0
        %v1107 = vadd.f32 0.0, %v1106
        %1108 = vdwg.mxu0
        %1109 = vmatpush.msra.mxu0 %v724
        %1110 = vmatpush.msra.mxu0 %v721
        %1111 = vmatpush.msra.mxu0 %v718
        %1112 = vmatpush.msra.mxu0 %v715
        %1113 = vmatpush.msra.mxu0 %v712
        %1114 = vmatpush.msra.mxu0 %v709
        %1115 = vmatpush.msra.mxu0 %v706
        %1116 = vmatpush.msra.mxu0 %v703
        %1117 = vmatpush.msra.mxu0 %v700
        %1118 = vmatpush.msra.mxu0 %v697
        %1119 = vmatpush.msra.mxu0 %v694
        %1120 = vmatpush.msra.mxu0 %v691
        %1121 = vmatpush.msra.mxu0 %v688
        %1122 = vmatpush.msra.mxu0 %v685
        %1123 = vmatpush.msra.mxu0 %v682
        %1124 = vmatpush.msra.mxu0 %v679
        %1125 = vmatmul.f32.gmra.mxu0 %v1064
        %v1126 = vpop.f32.mrf.mxu0
        %v1127 = vadd.f32 0.0, %v1126
        %1128 = vdwg.mxu0
        %v1129 = vadd.f32 %v1066, %v1087
        %v1130 = vadd.f32 %v1067, %v1107
        %v1131 = vxor.u32 %v1129, 2147483648
        %v1132 = vxor.u32 %v1130, 2147483648
        %v1133 = vmul.f32 %v1131, 1.442695
        %v1134 = vpow.pop %v1133
        %v1135 = vmul.f32 %v1132, 1.442695
        %v1136 = vpow.pop %v1135
        %v1137 = vadd.f32 %v1134, 1.0
        %v1138 = vadd.f32 %v1136, 1.0
        %v1139 = vrcp.pop %v1137
        %v1140 = vmul.f32 %v1137, %v1139
        %v1141 = vsub.f32 1.0, %v1140
        %v1142 = vmul.f32 %v1139, %v1141
        %v1143 = vadd.f32 %v1139, %v1142
        %vm1144 = vweird.f32 %v1137
        %vm1145 = vweird.f32 %v1139
        %vm1146 = vmor %vm1144, %vm1145
        %v1147 = vsel %vm1146, %v1139, %v1143
        %v1148 = vand.u32 2147483647, %v1137
        %vm1149 = vcmp.eq.f32.partialorder %v1148, 8.507059e+37
        %v1150 = vand.u32 %v1137, 2147483648
        %v1151 = vor.u32 1.1754944e-38, %v1150
        %v1152 = vsel %vm1149, %v1151, %v1147
        %v1153 = vmul.f32 1.0, %v1152
        %v1154 = vrcp.pop %v1138
        %v1155 = vmul.f32 %v1138, %v1154
        %v1156 = vsub.f32 1.0, %v1155
        %v1157 = vmul.f32 %v1154, %v1156
        %v1158 = vadd.f32 %v1154, %v1157
        %vm1159 = vweird.f32 %v1138
        %vm1160 = vweird.f32 %v1154
        %vm1161 = vmor %vm1159, %vm1160
        %v1162 = vsel %vm1161, %v1154, %v1158
        %v1163 = vand.u32 2147483647, %v1138
        %vm1164 = vcmp.eq.f32.partialorder %v1163, 8.507059e+37
        %v1165 = vand.u32 %v1138, 2147483648
        %v1166 = vor.u32 1.1754944e-38, %v1165
        %v1167 = vsel %vm1164, %v1166, %v1162
        %v1168 = vmul.f32 1.0, %v1167
        %v1169 = vadd.f32 %v1127, %v727
        %v1170 = vmul.f32 %v1153, %v1169
        %v1171 = vadd.f32 %v1068, %v1170
        %v1172 = vtanh.pop %v1171
        %v1173 = vsub.f32 1.0, %v1168
        %v1174 = vmul.f32 %v1173, %v1172
        %v1175 = vmul.f32 %v1168, %v1064
        %v1176 = vadd.f32 %v1174, %v1175
        %1177 = vst [vmem:[#allocation4 + $0x18] sm:$0xff] %v1176
        %1178 = vst [vmem:[#allocation2] sm:$0xff] %v1176
        %p1179 = scmp.eq.s32.totalorder %s30, 1
        // Predicated region
        $region77: #{tpu_custom_call.1} parent=51 // pred_check
          %p1180 = pneg %p1179
        $region78: #{tpu_custom_call.1} parent=51 // pred_check_branch
          %1182 = sbr.rel (%p1180) target = $region80
        $region79: #{tpu_custom_call.1} parent=51 // pred_region
          %1183 = vst [vmem:[#allocation15] sm:$0xff] %v1176
        $region80: #{tpu_custom_call.1} parent=51 // pred_fallthru
          _
        %v1184 = vld [vmem:[#allocation4] sm:$0xff]
        %v1185 = vld [vmem:[#allocation4 + $0x8] sm:$0xff]
        %v1186 = vld [vmem:[#allocation4 + $0x10] sm:$0xff]
        %v1187 = vld [vmem:[#allocation4 + $0x18] sm:$0xff]
        %v1188 = vpack.c.bf16 %v1185, %v1184
        %v1189 = vpack.c.bf16 %v1187, %v1186
        %v1190 = vld [vmem:[#allocation13] sm:$0xf]
        %v1191 = vld [vmem:[#allocation13 + $0x4] sm:$0xf]
        %v1192 = vld [vmem:[#allocation13 + $0x8] sm:$0xf]
        %v1193 = vld [vmem:[#allocation13 + $0xc] sm:$0xf]
        %v1194 = vld [vmem:[#allocation13 + $0x10] sm:$0xf]
        %v1195 = vld [vmem:[#allocation13 + $0x14] sm:$0xf]
        %v1196 = vld [vmem:[#allocation13 + $0x18] sm:$0xf]
        %v1197 = vld [vmem:[#allocation13 + $0x1c] sm:$0xf]
        %v1198 = vld [vmem:[#allocation13 + $0x20] sm:$0xf]
        %v1199 = vld [vmem:[#allocation13 + $0x24] sm:$0xf]
        %v1200 = vld [vmem:[#allocation13 + $0x28] sm:$0xf]
        %v1201 = vld [vmem:[#allocation13 + $0x2c] sm:$0xf]
        %v1202 = vld [vmem:[#allocation13 + $0x30] sm:$0xf]
        %v1203 = vld [vmem:[#allocation13 + $0x34] sm:$0xf]
        %v1204 = vld [vmem:[#allocation13 + $0x38] sm:$0xf]
        %v1205 = vld [vmem:[#allocation13 + $0x3c] sm:$0xf]
        %v1206 = vld [vmem:[%s7] sm:$0x1]
        %v1208 = vperm.slane %v1206, 0
        %v1226 = vunpack.c.l.b16 %v1190
        %v1227 = vunpack.c.l.b16 %v1191
        %v1228 = vunpack.c.l.b16 %v1192
        %v1229 = vunpack.c.l.b16 %v1193
        %v1230 = vunpack.c.l.b16 %v1194
        %v1231 = vunpack.c.l.b16 %v1195
        %v1232 = vunpack.c.l.b16 %v1196
        %v1233 = vunpack.c.l.b16 %v1197
        %v1234 = vunpack.c.l.b16 %v1198
        %v1235 = vunpack.c.l.b16 %v1199
        %v1236 = vunpack.c.l.b16 %v1200
        %v1237 = vunpack.c.l.b16 %v1201
        %v1238 = vunpack.c.l.b16 %v1202
        %v1239 = vunpack.c.l.b16 %v1203
        %v1240 = vunpack.c.l.b16 %v1204
        %v1241 = vunpack.c.l.b16 %v1205
        %v1242 = vpack.c.b16 %v1227, %v1226
        %v1243 = vpack.c.b16 %v1229, %v1228
        %v1244 = vpack.c.b16 %v1231, %v1230
        %v1245 = vpack.c.b16 %v1233, %v1232
        %v1246 = vpack.c.b16 %v1235, %v1234
        %v1247 = vpack.c.b16 %v1237, %v1236
        %v1248 = vpack.c.b16 %v1239, %v1238
        %v1249 = vpack.c.b16 %v1241, %v1240
        %1258 = vmatpush.bf16.msra.mxu0 %v1249
        %1259 = vmatpush.bf16.msra.mxu0 %v1248
        %1260 = vmatpush.bf16.msra.mxu0 %v1247
        %1261 = vmatpush.bf16.msra.mxu0 %v1246
        %1262 = vmatpush.bf16.msra.mxu0 %v1245
        %1263 = vmatpush.bf16.msra.mxu0 %v1244
        %1264 = vmatpush.bf16.msra.mxu0 %v1243
        %1265 = vmatpush.bf16.msra.mxu0 %v1242
        %1266 = vmatmul.bf16.gmra.mxu0 %v1188
        %v1267 = vpop.f32.mrf.mxu0
        %v1268 = vadd.f32 %v1208, %v1267
        %v1269 = vpop.f32.mrf.mxu0
        %v1270 = vadd.f32 %v1208, %v1269
        %1271 = vmatmul.bf16.gmra.mxu0 %v1189
        %v1272 = vpop.f32.mrf.mxu0
        %v1273 = vadd.f32 %v1208, %v1272
        %v1274 = vpop.f32.mrf.mxu0
        %v1275 = vadd.f32 %v1208, %v1274
        %1276 = vdwg.mxu0
        %1277 = vmax.xlane.f32.xlu0 %v1268
        %v1278 = vpop.xlane.xlu0 %1277
        %1279 = vmax.xlane.f32.xlu0 %v1270
        %v1280 = vpop.xlane.xlu0 %1279
        %1281 = vmax.xlane.f32.xlu0 %v1273
        %v1282 = vpop.xlane.xlu0 %1281
        %1283 = vmax.xlane.f32.xlu0 %v1275
        %v1284 = vpop.xlane.xlu0 %1283
        %v1285 = vsub.f32 %v1268, %v1278
        %v1286 = vsub.f32 %v1270, %v1280
        %v1287 = vsub.f32 %v1273, %v1282
        %v1288 = vsub.f32 %v1275, %v1284
        %v1289 = vmul.f32 %v1285, 1.442695
        %v1290 = vpow.pop %v1289
        %v1291 = vmul.f32 %v1286, 1.442695
        %v1292 = vpow.pop %v1291
        %v1293 = vmul.f32 %v1287, 1.442695
        %v1294 = vpow.pop %v1293
        %v1295 = vmul.f32 %v1288, 1.442695
        %v1296 = vpow.pop %v1295
        %1297 = vadd.xlane.f32.xlu0 %v1290
        %v1298 = vpop.xlane.xlu0 %1297
        %1299 = vadd.xlane.f32.xlu0 %v1292
        %v1300 = vpop.xlane.xlu0 %1299
        %1301 = vadd.xlane.f32.xlu0 %v1294
        %v1302 = vpop.xlane.xlu0 %1301
        %1303 = vadd.xlane.f32.xlu0 %v1296
        %v1304 = vpop.xlane.xlu0 %1303
        %v1305 = vlog2.pop %v1298
        %v1306 = vmul.f32 %v1305, 0.6931472
        %v1307 = vlog2.pop %v1300
        %v1308 = vmul.f32 %v1307, 0.6931472
        %v1309 = vlog2.pop %v1302
        %v1310 = vmul.f32 %v1309, 0.6931472
        %v1311 = vlog2.pop %v1304
        %v1312 = vmul.f32 %v1311, 0.6931472
        %v1313 = vadd.f32 %v1278, %v1306
        %v1314 = vadd.f32 %v1280, %v1308
        %v1315 = vadd.f32 %v1282, %v1310
        %v1316 = vadd.f32 %v1284, %v1312
        %v1317 = vsub.f32 %v1268, %v1313
        %v1318 = vsub.f32 %v1270, %v1314
        %v1319 = vsub.f32 %v1273, %v1315
        %v1320 = vsub.f32 %v1275, %v1316
        %1321 = vst [vmem:[%s413] sm:$0xff] %v1317
        %1322 = vst [vmem:[%s413 + $0x8] sm:$0xff] %v1318
        %1323 = vst [vmem:[%s413 + $0x10] sm:$0xff] %v1319
        %1324 = vst [vmem:[%s413 + $0x18] sm:$0xff] %v1320
        %s1325 = sand.u32 %s211, 1
        %s1326 = scalar_lea.sflag [#allocation7], %s1325
        %s1327 = sand.u32 %s211, 1
        %s1328 = smul.addr %s1327, 32
        %s1329 = scalar_lea.vmem [#allocation14], %s1328
        // Predicated region
        $region81: #{tpu_custom_call.1} parent=51 // pred_check
          %p1330 = pneg %p221
        $region82: #{tpu_custom_call.1} parent=51 // pred_check_branch
          %1332 = sbr.rel (%p1330) target = $region84
        $region83: #{tpu_custom_call.1} parent=51 // pred_region
          %s1333 = smul.u32 4, %s30
          %1335 = vsyncadd %s1326, 0
          %s1336 = smul.addr %s1333, 8
          %s1337 = scalar_lea.hbm %s8, %s1336
          %s1338 = sshll.u32 %s1329, 4
          %s1339 = int_to_ptr.vmem [resolvable:$true] %s1338
          %s1340 = sshll.u32 %s1337, 4
          %s1341 = int_to_ptr.hbm [resolvable:$true] %s1340
          %1346 = dma.vmem_to_hbm [thread:$0]  %s1339, 512, %s1341, %s1326, 128, 128, 8
        $region84: #{tpu_custom_call.1} parent=51 // pred_fallthru
          _
        // Predicated region
        $region85: #{tpu_custom_call.1} parent=51 // pred_check
          %p1347 = pneg %p242
        $region86: #{tpu_custom_call.1} parent=51 // pred_check_branch
          %1349 = sbr.rel (%p1347) target = $region88
        $region87: #{tpu_custom_call.1} parent=51 // pred_region
          %1351 = vsyncadd [#allocation16], 0
          %s1353 = sshll.u32 [#allocation15], 4
          %s1354 = int_to_ptr.vmem [resolvable:$true] %s1353
          %s1355 = sshll.u32 %s9, 4
          %s1356 = int_to_ptr.hbm [resolvable:$true] %s1355
          %1358 = dma.vmem_to_hbm [thread:$0]  %s1354, 128, %s1356, [#allocation16]
        $region88: #{tpu_custom_call.1} parent=51 // pred_fallthru
          _
        // Predicated region
        $region89: #{tpu_custom_call.1} parent=51 // pred_check
          %p1359 = pneg %p242
        $region90: #{tpu_custom_call.1} parent=51 // pred_check_branch
          %1361 = sbr.rel (%p1359) target = $region92
        $region91: #{tpu_custom_call.1} parent=51 // pred_region
          %1363 = dma.done [#allocation16], 128
        $region92: #{tpu_custom_call.1} parent=51 // pred_fallthru
          _
      $region52: #{tpu_custom_call.1} parent=5 // pred_fallthru
        _
      %p1364 = scmp.le.s32.totalorder 2, %s25
      // Predicated region
      $region93: #{tpu_custom_call.1} parent=5 // pred_check
        %p1365 = pneg %p1364
      $region94: #{tpu_custom_call.1} parent=5 // pred_check_branch
        %1367 = sbr.rel (%p1365) target = $region96
      $region95: #{tpu_custom_call.1} parent=5 // pred_region
        %s1368 = ssub.s32 %s25, 2
        // Predicated region
        $region97: #{tpu_custom_call.1} parent=95 // pred_check
          %p1369 = pneg %p227
        $region98: #{tpu_custom_call.1} parent=95 // pred_check_branch
          %1371 = sbr.rel (%p1369) target = $region100
        $region99: #{tpu_custom_call.1} parent=95 // pred_region
          %s1372 = sand.u32 %s212, 1
          %s1373 = scalar_lea.sflag [#allocation7], %s1372
          %s1374 = sand.u32 %s212, 1
          %s1375 = smul.addr %s1374, 32
          %s1376 = scalar_lea.vmem [#allocation14], %s1375
          %1378 = dma.done %s1373, 512
        $region100: #{tpu_custom_call.1} parent=95 // pred_fallthru
          _
      $region96: #{tpu_custom_call.1} parent=5 // pred_fallthru
        _
    $region6: #{tpu_custom_call.1} parent=1 // loop_footer
      %s29 = sadd.s32 1, %s25
    $region7: #{tpu_custom_call.1} parent=1 // loop_footer_branch
      %24 = sbr.rel target = $region3
    $region8: #{tpu_custom_call.1} parent=1 // loop_exit
      _
    %1379 = vsyncpa [#allocation6], 1
    %s1380 = scalar_lea.sflag [#allocation6], 1
    %1381 = vsyncpa %s1380, 1
    %1382 = vsyncpa [#allocation9], 1
    %1383 = vsyncpa [#allocation12], 1
    %1384 = vsyncpa [#allocation7], 1
    %s1385 = scalar_lea.sflag [#allocation7], 1
    %1386 = vsyncpa %s1385, 1
    %1387 = vsyncpa [#allocation16], 1

</llo_original>
